<compile_context>
chip_gen: v7x
topology: tpu7x:2x2x1
jax: 0.10.0
libtpu: 0.0.40
codegen_flags: <defaults>
</compile_context>

<pallas_src>
import functools

import jax
import jax.numpy as jnp
from jax.experimental import pallas as pl
from jax.experimental.pallas import tpu as pltpu


# MLP layer output sizes (hidden dims from the PyTorch module)
HIDDEN_SIZES = [128, 128, 64, 64, 32, 1]
LANE = 128  # TPU lane width; all feature dims are padded to a multiple of this


def _round_up(x, m):
    return ((x + m - 1) // m) * m


def _mlp_kernel(x_ref,
                w1, b1, w2, b2, w3, b3, w4, b4, w5, b5, w6, b6,
                o_ref):
    """Fused 6-layer MLP on a (tile_b, 128) batch tile. All dims lane-padded."""

    def layer(h, w_ref, b_ref, relu=True):
        # MXU matmul with f32 accumulation; operands cast to the weight dtype
        # (bf16 or f32). Bias add / ReLU stay in f32 (v5e-safe elementwise).
        acc = jnp.dot(h.astype(w_ref.dtype), w_ref[...],
                      preferred_element_type=jnp.float32) + b_ref[...]
        return jnp.maximum(acc, 0.0) if relu else acc

    h = x_ref[...]
    h = layer(h, w1, b1)
    h = layer(h, w2, b2)
    h = layer(h, w3, b3)
    h = layer(h, w4, b4)
    h = layer(h, w5, b5)
    # Final layer: no ReLU; padded output columns are exactly zero.
    o_ref[...] = layer(h, w6, b6, relu=False).astype(o_ref.dtype)


def init_params(key, input_size):
    """Deterministic PyTorch-style (uniform +-1/sqrt(fan_in)) init.

    Weights are stored (in_features, out_features) so y = x @ W + b matches
    PyTorch's x @ W_pt.T + b."""
    params = []
    fan_in = input_size
    for out in HIDDEN_SIZES:
        key, kw, kb = jax.random.split(key, 3)
        bound = 1.0 / (fan_in ** 0.5)
        w = jax.random.uniform(kw, (fan_in, out), jnp.float32, -bound, bound)
        b = jax.random.uniform(kb, (1, out), jnp.float32, -bound, bound)
        params.append((w, b))
        fan_in = out
    return params


def _pad_params(params, input_size, mxu_dtype):
    """Zero-pad every weight/bias so all feature dims are multiples of 128.

    Zero rows/cols keep the math exact (padded activations stay 0 through
    ReLU layers; padded output columns of the last layer are 0 and sliced off).
    Weights are cast to the MXU operand dtype; biases stay f32."""
    padded = []
    fan_in = input_size
    for w, b in params:
        out = w.shape[1]
        fi_pad = _round_up(fan_in, LANE)
        out_pad = _round_up(out, LANE)
        wp = jnp.zeros((fi_pad, out_pad), jnp.float32).at[:fan_in, :out].set(w)
        bp = jnp.zeros((1, out_pad), jnp.float32).at[:, :out].set(b)
        padded.append((wp.astype(mxu_dtype), bp))
        fan_in = out
    return padded


@functools.partial(jax.jit, static_argnames=("tile_b", "mxu_dtype"))
def mlp_forward(x, params, tile_b=256, mxu_dtype="float32"):
    """Run the fused MLP kernel. x: (B, input_size) f32 -> (B, 1) f32.

    tile_b: batch tile (MXU M dim / DMA granule). Sweep 256/512/1024; keep the
            resulting grid >= 2 on v7x so both TensorCores get work.
    mxu_dtype: "float32" or "bfloat16" for the MXU operands (f32 accumulation).
    """
    B, in_dim = x.shape
    mxu_dt = jnp.dtype(mxu_dtype)

    # --- host-side (traced, cheap) padding to lane-dense shapes -------------
    in_pad = _round_up(in_dim, LANE)
    out_pad = _round_up(HIDDEN_SIZES[-1], LANE)
    pparams = _pad_params(params, in_dim, mxu_dt)

    b_pad = _round_up(B, tile_b)           # no divisibility requirement on B
    xp = jnp.zeros((b_pad, in_pad), jnp.float32).at[:B, :in_dim].set(x)

    n_tiles = b_pad // tile_b

    # --- specs ---------------------------------------------------------------
    x_spec = pl.BlockSpec((tile_b, in_pad), lambda i: (i, 0))
    o_spec = pl.BlockSpec((tile_b, out_pad), lambda i: (i, 0))  # lane-dense out

    param_specs = []
    flat_params = []
    for w, b in pparams:
        # Constant index_map -> DMA'd once, resident across all grid steps.
        param_specs.append(pl.BlockSpec(w.shape, lambda i: (0, 0)))
        param_specs.append(pl.BlockSpec(b.shape, lambda i: (0, 0)))
        flat_params.extend([w, b])

    out_full = pl.pallas_call(
        _mlp_kernel,
        out_shape=jax.ShapeDtypeStruct((b_pad, out_pad), jnp.float32),
        grid_spec=pl.GridSpec(
            grid=(n_tiles,),
            in_specs=[x_spec] + param_specs,
            out_specs=o_spec,
        ),
        compiler_params=pltpu.CompilerParams(
            dimension_semantics=("parallel",)),
    )(xp, *flat_params)

    # Un-pad: keep real rows and the single real output column.
    return out_full[:B, :1]


def mlp_reference(x, params):
    """Pure-JAX reference (unpadded, f32) for correctness checking."""
    h = x
    for idx, (w, b) in enumerate(params):
        h = h @ w + b
        if idx < len(params) - 1:
            h = jnp.maximum(h, 0.0)
    return h


if __name__ == "__main__":
    key = jax.random.PRNGKey(0)
    k_x, k_p = jax.random.split(key)

    batch = 512          # modest, but enough for grid=(2,) at tile_b=256
    input_size = 16      # X_train.shape[1] analogue (small synthetic feature dim)

    x = jax.random.normal(k_x, (batch, input_size), jnp.float32)
    params = init_params(k_p, input_size)

    ref = mlp_reference(x, params)

    # f32 MXU operands: exact match vs reference.
    out_f32 = jax.block_until_ready(mlp_forward(x, params, tile_b=256,
                                                mxu_dtype="float32"))
    assert out_f32.shape == (batch, 1)
    assert jnp.allclose(out_f32, ref, atol=1e-4, rtol=1e-4), "f32 mismatch"

    # bf16 MXU operands (v6e/v7x fast path): looser tolerance.
    out_bf16 = jax.block_until_ready(mlp_forward(x, params, tile_b=256,
                                                 mxu_dtype="bfloat16"))
    assert out_bf16.shape == (batch, 1)
    assert jnp.allclose(out_bf16, ref, atol=5e-2, rtol=5e-2), "bf16 mismatch"

    print("KERNEL_OK")
</pallas_src>

<mosaic_0001>
module attributes {stable_mosaic.version = 11 : i64} {
  func.func @_mlp_kernel(%arg0: i32, %arg1: memref<256x128xf32, #tpu.memory_space<vmem>>, %arg2: memref<128x128xf32, #tpu.memory_space<vmem>>, %arg3: memref<1x128xf32, #tpu.memory_space<vmem>>, %arg4: memref<128x128xf32, #tpu.memory_space<vmem>>, %arg5: memref<1x128xf32, #tpu.memory_space<vmem>>, %arg6: memref<128x128xf32, #tpu.memory_space<vmem>>, %arg7: memref<1x128xf32, #tpu.memory_space<vmem>>, %arg8: memref<128x128xf32, #tpu.memory_space<vmem>>, %arg9: memref<1x128xf32, #tpu.memory_space<vmem>>, %arg10: memref<128x128xf32, #tpu.memory_space<vmem>>, %arg11: memref<1x128xf32, #tpu.memory_space<vmem>>, %arg12: memref<128x128xf32, #tpu.memory_space<vmem>>, %arg13: memref<1x128xf32, #tpu.memory_space<vmem>>, %arg14: memref<256x128xf32, #tpu.memory_space<vmem>>) attributes {dimension_semantics = [#tpu.dimension_semantics<parallel>], iteration_bounds = array<i64: 2>, scalar_prefetch = 0 : i64, scratch_operands = 0 : i64, tpu.core_type = #tpu.core_type<tc>, window_params = [{transform_indices = @transform_0, window_bounds = array<i64: 256, 128>}, {pipeline_mode = #tpu.pipeline_mode<synchronous>, transform_indices = @transform_1, window_bounds = array<i64: 128, 128>}, {pipeline_mode = #tpu.pipeline_mode<synchronous>, transform_indices = @transform_2, window_bounds = array<i64: 1, 128>}, {pipeline_mode = #tpu.pipeline_mode<synchronous>, transform_indices = @transform_3, window_bounds = array<i64: 128, 128>}, {pipeline_mode = #tpu.pipeline_mode<synchronous>, transform_indices = @transform_4, window_bounds = array<i64: 1, 128>}, {pipeline_mode = #tpu.pipeline_mode<synchronous>, transform_indices = @transform_5, window_bounds = array<i64: 128, 128>}, {pipeline_mode = #tpu.pipeline_mode<synchronous>, transform_indices = @transform_6, window_bounds = array<i64: 1, 128>}, {pipeline_mode = #tpu.pipeline_mode<synchronous>, transform_indices = @transform_7, window_bounds = array<i64: 128, 128>}, {pipeline_mode = #tpu.pipeline_mode<synchronous>, transform_indices = @transform_8, window_bounds = array<i64: 1, 128>}, {pipeline_mode = #tpu.pipeline_mode<synchronous>, transform_indices = @transform_9, window_bounds = array<i64: 128, 128>}, {pipeline_mode = #tpu.pipeline_mode<synchronous>, transform_indices = @transform_10, window_bounds = array<i64: 1, 128>}, {pipeline_mode = #tpu.pipeline_mode<synchronous>, transform_indices = @transform_11, window_bounds = array<i64: 128, 128>}, {pipeline_mode = #tpu.pipeline_mode<synchronous>, transform_indices = @transform_12, window_bounds = array<i64: 1, 128>}, {transform_indices = @transform_13, window_bounds = array<i64: 256, 128>}]} {
    %c0 = arith.constant 0 : index
    %c0_0 = arith.constant 0 : index
    %0 = vector.load %arg1[%c0, %c0_0] : memref<256x128xf32, #tpu.memory_space<vmem>>, vector<256x128xf32>
    %c0_1 = arith.constant 0 : index
    %c0_2 = arith.constant 0 : index
    %1 = vector.load %arg2[%c0_1, %c0_2] : memref<128x128xf32, #tpu.memory_space<vmem>>, vector<128x128xf32>
    %cst = arith.constant dense<0.000000e+00> : vector<256x128xf32>
    %2 = tpu.matmul %0, %1, %cst {dimension_numbers = #tpu.dot_dimension_numbers<[1], [0], [0], [1], [0, 0, 1, 1], [], []>} : vector<256x128xf32>, vector<128x128xf32>, vector<256x128xf32> -> vector<256x128xf32>
    %c0_3 = arith.constant 0 : index
    %c0_4 = arith.constant 0 : index
    %3 = vector.load %arg3[%c0_3, %c0_4] : memref<1x128xf32, #tpu.memory_space<vmem>>, vector<1x128xf32>
    %4 = vector.broadcast %3 : vector<1x128xf32> to vector<256x128xf32>
    %5 = arith.addf %2, %4 : vector<256x128xf32>
    %cst_5 = arith.constant 0.000000e+00 : f32
    %6 = vector.broadcast %cst_5 : f32 to vector<256x128xf32>
    %7 = arith.maximumf %5, %6 : vector<256x128xf32>
    %c0_6 = arith.constant 0 : index
    %c0_7 = arith.constant 0 : index
    %8 = vector.load %arg4[%c0_6, %c0_7] : memref<128x128xf32, #tpu.memory_space<vmem>>, vector<128x128xf32>
    %cst_8 = arith.constant dense<0.000000e+00> : vector<256x128xf32>
    %9 = tpu.matmul %7, %8, %cst_8 {dimension_numbers = #tpu.dot_dimension_numbers<[1], [0], [0], [1], [0, 0, 1, 1], [], []>} : vector<256x128xf32>, vector<128x128xf32>, vector<256x128xf32> -> vector<256x128xf32>
    %c0_9 = arith.constant 0 : index
    %c0_10 = arith.constant 0 : index
    %10 = vector.load %arg5[%c0_9, %c0_10] : memref<1x128xf32, #tpu.memory_space<vmem>>, vector<1x128xf32>
    %11 = vector.broadcast %10 : vector<1x128xf32> to vector<256x128xf32>
    %12 = arith.addf %9, %11 : vector<256x128xf32>
    %cst_11 = arith.constant 0.000000e+00 : f32
    %13 = vector.broadcast %cst_11 : f32 to vector<256x128xf32>
    %14 = arith.maximumf %12, %13 : vector<256x128xf32>
    %c0_12 = arith.constant 0 : index
    %c0_13 = arith.constant 0 : index
    %15 = vector.load %arg6[%c0_12, %c0_13] : memref<128x128xf32, #tpu.memory_space<vmem>>, vector<128x128xf32>
    %cst_14 = arith.constant dense<0.000000e+00> : vector<256x128xf32>
    %16 = tpu.matmul %14, %15, %cst_14 {dimension_numbers = #tpu.dot_dimension_numbers<[1], [0], [0], [1], [0, 0, 1, 1], [], []>} : vector<256x128xf32>, vector<128x128xf32>, vector<256x128xf32> -> vector<256x128xf32>
    %c0_15 = arith.constant 0 : index
    %c0_16 = arith.constant 0 : index
    %17 = vector.load %arg7[%c0_15, %c0_16] : memref<1x128xf32, #tpu.memory_space<vmem>>, vector<1x128xf32>
    %18 = vector.broadcast %17 : vector<1x128xf32> to vector<256x128xf32>
    %19 = arith.addf %16, %18 : vector<256x128xf32>
    %cst_17 = arith.constant 0.000000e+00 : f32
    %20 = vector.broadcast %cst_17 : f32 to vector<256x128xf32>
    %21 = arith.maximumf %19, %20 : vector<256x128xf32>
    %c0_18 = arith.constant 0 : index
    %c0_19 = arith.constant 0 : index
    %22 = vector.load %arg8[%c0_18, %c0_19] : memref<128x128xf32, #tpu.memory_space<vmem>>, vector<128x128xf32>
    %cst_20 = arith.constant dense<0.000000e+00> : vector<256x128xf32>
    %23 = tpu.matmul %21, %22, %cst_20 {dimension_numbers = #tpu.dot_dimension_numbers<[1], [0], [0], [1], [0, 0, 1, 1], [], []>} : vector<256x128xf32>, vector<128x128xf32>, vector<256x128xf32> -> vector<256x128xf32>
    %c0_21 = arith.constant 0 : index
    %c0_22 = arith.constant 0 : index
    %24 = vector.load %arg9[%c0_21, %c0_22] : memref<1x128xf32, #tpu.memory_space<vmem>>, vector<1x128xf32>
    %25 = vector.broadcast %24 : vector<1x128xf32> to vector<256x128xf32>
    %26 = arith.addf %23, %25 : vector<256x128xf32>
    %cst_23 = arith.constant 0.000000e+00 : f32
    %27 = vector.broadcast %cst_23 : f32 to vector<256x128xf32>
    %28 = arith.maximumf %26, %27 : vector<256x128xf32>
    %c0_24 = arith.constant 0 : index
    %c0_25 = arith.constant 0 : index
    %29 = vector.load %arg10[%c0_24, %c0_25] : memref<128x128xf32, #tpu.memory_space<vmem>>, vector<128x128xf32>
    %cst_26 = arith.constant dense<0.000000e+00> : vector<256x128xf32>
    %30 = tpu.matmul %28, %29, %cst_26 {dimension_numbers = #tpu.dot_dimension_numbers<[1], [0], [0], [1], [0, 0, 1, 1], [], []>} : vector<256x128xf32>, vector<128x128xf32>, vector<256x128xf32> -> vector<256x128xf32>
    %c0_27 = arith.constant 0 : index
    %c0_28 = arith.constant 0 : index
    %31 = vector.load %arg11[%c0_27, %c0_28] : memref<1x128xf32, #tpu.memory_space<vmem>>, vector<1x128xf32>
    %32 = vector.broadcast %31 : vector<1x128xf32> to vector<256x128xf32>
    %33 = arith.addf %30, %32 : vector<256x128xf32>
    %cst_29 = arith.constant 0.000000e+00 : f32
    %34 = vector.broadcast %cst_29 : f32 to vector<256x128xf32>
    %35 = arith.maximumf %33, %34 : vector<256x128xf32>
    %c0_30 = arith.constant 0 : index
    %c0_31 = arith.constant 0 : index
    %36 = vector.load %arg12[%c0_30, %c0_31] : memref<128x128xf32, #tpu.memory_space<vmem>>, vector<128x128xf32>
    %cst_32 = arith.constant dense<0.000000e+00> : vector<256x128xf32>
    %37 = tpu.matmul %35, %36, %cst_32 {dimension_numbers = #tpu.dot_dimension_numbers<[1], [0], [0], [1], [0, 0, 1, 1], [], []>} : vector<256x128xf32>, vector<128x128xf32>, vector<256x128xf32> -> vector<256x128xf32>
    %c0_33 = arith.constant 0 : index
    %c0_34 = arith.constant 0 : index
    %38 = vector.load %arg13[%c0_33, %c0_34] : memref<1x128xf32, #tpu.memory_space<vmem>>, vector<1x128xf32>
    %39 = vector.broadcast %38 : vector<1x128xf32> to vector<256x128xf32>
    %40 = arith.addf %37, %39 : vector<256x128xf32>
    %c0_35 = arith.constant 0 : index
    %c0_36 = arith.constant 0 : index
    %41 = vector.load %arg14[%c0_35, %c0_36] : memref<256x128xf32, #tpu.memory_space<vmem>>, vector<256x128xf32>
    tpu.vector_store %arg14[%c0_35, %c0_36], %40 {strides = array<i32>} : memref<256x128xf32, #tpu.memory_space<vmem>>, vector<256x128xf32>,
    return
  }
  func.func @transform_0(%arg0: i32) -> (i32, i32) {
    %c0_i32 = arith.constant 0 : i32
    %c0_i32_0 = arith.constant 0 : i32
    return %arg0, %c0_i32 : i32, i32
  }
  func.func @transform_1(%arg0: i32) -> (i32, i32) {
    %c0_i32 = arith.constant 0 : i32
    %c0_i32_0 = arith.constant 0 : i32
    %c0_i32_1 = arith.constant 0 : i32
    return %c0_i32, %c0_i32_0 : i32, i32
  }
  func.func @transform_2(%arg0: i32) -> (i32, i32) {
    %c0_i32 = arith.constant 0 : i32
    %c0_i32_0 = arith.constant 0 : i32
    %c0_i32_1 = arith.constant 0 : i32
    return %c0_i32, %c0_i32_0 : i32, i32
  }
  func.func @transform_3(%arg0: i32) -> (i32, i32) {
    %c0_i32 = arith.constant 0 : i32
    %c0_i32_0 = arith.constant 0 : i32
    %c0_i32_1 = arith.constant 0 : i32
    return %c0_i32, %c0_i32_0 : i32, i32
  }
  func.func @transform_4(%arg0: i32) -> (i32, i32) {
    %c0_i32 = arith.constant 0 : i32
    %c0_i32_0 = arith.constant 0 : i32
    %c0_i32_1 = arith.constant 0 : i32
    return %c0_i32, %c0_i32_0 : i32, i32
  }
  func.func @transform_5(%arg0: i32) -> (i32, i32) {
    %c0_i32 = arith.constant 0 : i32
    %c0_i32_0 = arith.constant 0 : i32
    %c0_i32_1 = arith.constant 0 : i32
    return %c0_i32, %c0_i32_0 : i32, i32
  }
  func.func @transform_6(%arg0: i32) -> (i32, i32) {
    %c0_i32 = arith.constant 0 : i32
    %c0_i32_0 = arith.constant 0 : i32
    %c0_i32_1 = arith.constant 0 : i32
    return %c0_i32, %c0_i32_0 : i32, i32
  }
  func.func @transform_7(%arg0: i32) -> (i32, i32) {
    %c0_i32 = arith.constant 0 : i32
    %c0_i32_0 = arith.constant 0 : i32
    %c0_i32_1 = arith.constant 0 : i32
    return %c0_i32, %c0_i32_0 : i32, i32
  }
  func.func @transform_8(%arg0: i32) -> (i32, i32) {
    %c0_i32 = arith.constant 0 : i32
    %c0_i32_0 = arith.constant 0 : i32
    %c0_i32_1 = arith.constant 0 : i32
    return %c0_i32, %c0_i32_0 : i32, i32
  }
  func.func @transform_9(%arg0: i32) -> (i32, i32) {
    %c0_i32 = arith.constant 0 : i32
    %c0_i32_0 = arith.constant 0 : i32
    %c0_i32_1 = arith.constant 0 : i32
    return %c0_i32, %c0_i32_0 : i32, i32
  }
  func.func @transform_10(%arg0: i32) -> (i32, i32) {
    %c0_i32 = arith.constant 0 : i32
    %c0_i32_0 = arith.constant 0 : i32
    %c0_i32_1 = arith.constant 0 : i32
    return %c0_i32, %c0_i32_0 : i32, i32
  }
  func.func @transform_11(%arg0: i32) -> (i32, i32) {
    %c0_i32 = arith.constant 0 : i32
    %c0_i32_0 = arith.constant 0 : i32
    %c0_i32_1 = arith.constant 0 : i32
    return %c0_i32, %c0_i32_0 : i32, i32
  }
  func.func @transform_12(%arg0: i32) -> (i32, i32) {
    %c0_i32 = arith.constant 0 : i32
    %c0_i32_0 = arith.constant 0 : i32
    %c0_i32_1 = arith.constant 0 : i32
    return %c0_i32, %c0_i32_0 : i32, i32
  }
  func.func @transform_13(%arg0: i32) -> (i32, i32) {
    %c0_i32 = arith.constant 0 : i32
    %c0_i32_0 = arith.constant 0 : i32
    return %arg0, %c0_i32 : i32, i32
  }
}

</mosaic_0001>

<llo_original>
// kernel: mlp_forward.1
$region0: #{mlp_forward.1}
  #allocation0 [shape = 'u32[]', space=smem, size = 0x4, offset = 0x4, fixed_abs, tag = 'smem constant byte address 0x4 - core index']
  #allocation1 [shape = 'u32[144,128]{1,0:T(1,128)}', space=vmem, size = 0x12000, scoped, tag = 'internal scratch']
  %s0 = inlined_call_operand.vmem [shape: f32[512,128], index: 0, kind: input, shape index: {}]
  %s1 = inlined_call_operand.vmem [shape: f32[128,128], index: 1, kind: input, shape index: {}]
  %s2 = inlined_call_operand.vmem [shape: f32[1,128], index: 2, kind: input, shape index: {}]
  %s3 = inlined_call_operand.vmem [shape: f32[128,128], index: 3, kind: input, shape index: {}]
  %s4 = inlined_call_operand.vmem [shape: f32[1,128], index: 4, kind: input, shape index: {}]
  %s5 = inlined_call_operand.vmem [shape: f32[128,128], index: 5, kind: input, shape index: {}]
  %s6 = inlined_call_operand.vmem [shape: f32[1,128], index: 6, kind: input, shape index: {}]
  %s7 = inlined_call_operand.vmem [shape: f32[128,128], index: 7, kind: input, shape index: {}]
  %s8 = inlined_call_operand.vmem [shape: f32[1,128], index: 8, kind: input, shape index: {}]
  %s9 = inlined_call_operand.vmem [shape: f32[128,128], index: 9, kind: input, shape index: {}]
  %s10 = inlined_call_operand.vmem [shape: f32[1,128], index: 10, kind: input, shape index: {}]
  %s11 = inlined_call_operand.vmem [shape: f32[128,128], index: 11, kind: input, shape index: {}]
  %s12 = inlined_call_operand.vmem [shape: f32[1,128], index: 12, kind: input, shape index: {}]
  %s13 = inlined_call_operand.vmem [shape: f32[512,128], index: 13, kind: output, shape index: {}]
  %s14 = sld [smem:[#allocation0]]
  $region85: #{mlp_forward.1} parent=0
    _
  %s16 = ssub.s32 1, %s14
  %s17 = scalar_select 0, %s16, %s14
  loop: start=0, step=1, limit=4
  $region2: #{mlp_forward.1} parent=0 // loop_pre_header
    _
  $region3: #{mlp_forward.1} parent=0 // loop_header
    %s19 = sphi 0, %s23
    %p20 = scmp.ge.s32.totalorder %s19, 4
    %s29 = sphi 0, %s31
    %s32 = sphi 0, %s29
    %s33 = sphi 0, %s32
    %s49 = sphi 0, %s33
    %s53 = sphi 0, %s53
    %s55 = sphi 0, %s53
    %s56 = sphi 0, %s55
    %s70 = sphi 0, %s56
    %s74 = sphi 0, %s74
    %s76 = sphi 0, %s74
    %s77 = sphi 0, %s76
    %s91 = sphi 0, %s77
    %s95 = sphi 0, %s95
    %s97 = sphi 0, %s95
    %s98 = sphi 0, %s97
    %s112 = sphi 0, %s98
    %s116 = sphi 0, %s116
    %s118 = sphi 0, %s116
    %s119 = sphi 0, %s118
    %s133 = sphi 0, %s119
    %s137 = sphi 0, %s137
    %s139 = sphi 0, %s137
    %s140 = sphi 0, %s139
    %s154 = sphi 0, %s140
    %s158 = sphi 0, %s158
    %s160 = sphi 0, %s158
    %s161 = sphi 0, %s160
    %s175 = sphi 0, %s161
    %s179 = sphi 0, %s179
    %s181 = sphi 0, %s179
    %s182 = sphi 0, %s181
    %s196 = sphi 0, %s182
    %s200 = sphi 0, %s200
    %s202 = sphi 0, %s200
    %s203 = sphi 0, %s202
    %s217 = sphi 0, %s203
    %s221 = sphi 0, %s221
    %s223 = sphi 0, %s221
    %s224 = sphi 0, %s223
    %s238 = sphi 0, %s224
    %s242 = sphi 0, %s242
    %s244 = sphi 0, %s242
    %s245 = sphi 0, %s244
    %s259 = sphi 0, %s245
    %s263 = sphi 0, %s263
    %s265 = sphi 0, %s263
    %s266 = sphi 0, %s265
    %s280 = sphi 0, %s266
    %s284 = sphi 0, %s284
    %s286 = sphi 0, %s284
    %s287 = sphi 0, %s286
    %s301 = sphi 0, %s287
    %s307 = sphi 0, %s309
    %s310 = sphi 0, %s307
    %s311 = sphi 0, %s310
    %s327 = sphi 0, %s311
  $region4: #{mlp_forward.1} parent=0 // loop_header_branch
    %22 = sbr.rel (%p20) target = $region8
  $region5: #{mlp_forward.1} parent=0 // loop_body
    %s24 = ssub.s32 %s19, 1
    %s25 = ssub.s32 %s19, 2
    %s26 = sadd.s32 %s19, 1
    %s27 = ssub.s32 %s19, %s26
    %p28 = scmp.eq.s32.totalorder %s27, 0
    %s30 = sadd.s32 %s29, 1
    %s31 = scalar_select %p28, %s29, %s30
    %p34 = pneg %p28
    %p35 = scmp.eq.s32.totalorder %s19, 1
    %p36 = por %p34, %p35
    %p37 = scmp.ne.s32.totalorder %s29, %s32
    %p38 = scmp.eq.s32.totalorder %s19, 0
    %p39 = por %p37, %p38
    %p40 = scmp.ne.s32.totalorder %s29, %s32
    %p41 = scmp.eq.s32.totalorder %s24, 1
    %p42 = por %p40, %p41
    %p43 = scmp.ne.s32.totalorder %s32, %s33
    %p44 = scmp.eq.s32.totalorder %s24, 0
    %p45 = por %p43, %p44
    %p46 = scmp.ne.s32.totalorder %s32, %s33
    %p47 = scmp.eq.s32.totalorder %s25, 1
    %p48 = por %p46, %p47
    %p50 = scmp.ne.s32.totalorder %s33, %s49
    %p51 = scmp.eq.s32.totalorder %s25, 0
    %p52 = por %p50, %p51
    %s54 = sadd.s32 %s53, 1
    %p57 = scmp.eq.s32.totalorder %s19, 1
    %p58 = scmp.ne.s32.totalorder %s53, %s55
    %p59 = scmp.eq.s32.totalorder %s19, 0
    %p60 = por %p58, %p59
    %p61 = scmp.ne.s32.totalorder %s53, %s55
    %p62 = scmp.eq.s32.totalorder %s24, 1
    %p63 = por %p61, %p62
    %p64 = scmp.ne.s32.totalorder %s55, %s56
    %p65 = scmp.eq.s32.totalorder %s24, 0
    %p66 = por %p64, %p65
    %p67 = scmp.ne.s32.totalorder %s55, %s56
    %p68 = scmp.eq.s32.totalorder %s25, 1
    %p69 = por %p67, %p68
    %p71 = scmp.ne.s32.totalorder %s56, %s70
    %p72 = scmp.eq.s32.totalorder %s25, 0
    %p73 = por %p71, %p72
    %s75 = sadd.s32 %s74, 1
    %p78 = scmp.eq.s32.totalorder %s19, 1
    %p79 = scmp.ne.s32.totalorder %s74, %s76
    %p80 = scmp.eq.s32.totalorder %s19, 0
    %p81 = por %p79, %p80
    %p82 = scmp.ne.s32.totalorder %s74, %s76
    %p83 = scmp.eq.s32.totalorder %s24, 1
    %p84 = por %p82, %p83
    %p85 = scmp.ne.s32.totalorder %s76, %s77
    %p86 = scmp.eq.s32.totalorder %s24, 0
    %p87 = por %p85, %p86
    %p88 = scmp.ne.s32.totalorder %s76, %s77
    %p89 = scmp.eq.s32.totalorder %s25, 1
    %p90 = por %p88, %p89
    %p92 = scmp.ne.s32.totalorder %s77, %s91
    %p93 = scmp.eq.s32.totalorder %s25, 0
    %p94 = por %p92, %p93
    %s96 = sadd.s32 %s95, 1
    %p99 = scmp.eq.s32.totalorder %s19, 1
    %p100 = scmp.ne.s32.totalorder %s95, %s97
    %p101 = scmp.eq.s32.totalorder %s19, 0
    %p102 = por %p100, %p101
    %p103 = scmp.ne.s32.totalorder %s95, %s97
    %p104 = scmp.eq.s32.totalorder %s24, 1
    %p105 = por %p103, %p104
    %p106 = scmp.ne.s32.totalorder %s97, %s98
    %p107 = scmp.eq.s32.totalorder %s24, 0
    %p108 = por %p106, %p107
    %p109 = scmp.ne.s32.totalorder %s97, %s98
    %p110 = scmp.eq.s32.totalorder %s25, 1
    %p111 = por %p109, %p110
    %p113 = scmp.ne.s32.totalorder %s98, %s112
    %p114 = scmp.eq.s32.totalorder %s25, 0
    %p115 = por %p113, %p114
    %s117 = sadd.s32 %s116, 1
    %p120 = scmp.eq.s32.totalorder %s19, 1
    %p121 = scmp.ne.s32.totalorder %s116, %s118
    %p122 = scmp.eq.s32.totalorder %s19, 0
    %p123 = por %p121, %p122
    %p124 = scmp.ne.s32.totalorder %s116, %s118
    %p125 = scmp.eq.s32.totalorder %s24, 1
    %p126 = por %p124, %p125
    %p127 = scmp.ne.s32.totalorder %s118, %s119
    %p128 = scmp.eq.s32.totalorder %s24, 0
    %p129 = por %p127, %p128
    %p130 = scmp.ne.s32.totalorder %s118, %s119
    %p131 = scmp.eq.s32.totalorder %s25, 1
    %p132 = por %p130, %p131
    %p134 = scmp.ne.s32.totalorder %s119, %s133
    %p135 = scmp.eq.s32.totalorder %s25, 0
    %p136 = por %p134, %p135
    %s138 = sadd.s32 %s137, 1
    %p141 = scmp.eq.s32.totalorder %s19, 1
    %p142 = scmp.ne.s32.totalorder %s137, %s139
    %p143 = scmp.eq.s32.totalorder %s19, 0
    %p144 = por %p142, %p143
    %p145 = scmp.ne.s32.totalorder %s137, %s139
    %p146 = scmp.eq.s32.totalorder %s24, 1
    %p147 = por %p145, %p146
    %p148 = scmp.ne.s32.totalorder %s139, %s140
    %p149 = scmp.eq.s32.totalorder %s24, 0
    %p150 = por %p148, %p149
    %p151 = scmp.ne.s32.totalorder %s139, %s140
    %p152 = scmp.eq.s32.totalorder %s25, 1
    %p153 = por %p151, %p152
    %p155 = scmp.ne.s32.totalorder %s140, %s154
    %p156 = scmp.eq.s32.totalorder %s25, 0
    %p157 = por %p155, %p156
    %s159 = sadd.s32 %s158, 1
    %p162 = scmp.eq.s32.totalorder %s19, 1
    %p163 = scmp.ne.s32.totalorder %s158, %s160
    %p164 = scmp.eq.s32.totalorder %s19, 0
    %p165 = por %p163, %p164
    %p166 = scmp.ne.s32.totalorder %s158, %s160
    %p167 = scmp.eq.s32.totalorder %s24, 1
    %p168 = por %p166, %p167
    %p169 = scmp.ne.s32.totalorder %s160, %s161
    %p170 = scmp.eq.s32.totalorder %s24, 0
    %p171 = por %p169, %p170
    %p172 = scmp.ne.s32.totalorder %s160, %s161
    %p173 = scmp.eq.s32.totalorder %s25, 1
    %p174 = por %p172, %p173
    %p176 = scmp.ne.s32.totalorder %s161, %s175
    %p177 = scmp.eq.s32.totalorder %s25, 0
    %p178 = por %p176, %p177
    %s180 = sadd.s32 %s179, 1
    %p183 = scmp.eq.s32.totalorder %s19, 1
    %p184 = scmp.ne.s32.totalorder %s179, %s181
    %p185 = scmp.eq.s32.totalorder %s19, 0
    %p186 = por %p184, %p185
    %p187 = scmp.ne.s32.totalorder %s179, %s181
    %p188 = scmp.eq.s32.totalorder %s24, 1
    %p189 = por %p187, %p188
    %p190 = scmp.ne.s32.totalorder %s181, %s182
    %p191 = scmp.eq.s32.totalorder %s24, 0
    %p192 = por %p190, %p191
    %p193 = scmp.ne.s32.totalorder %s181, %s182
    %p194 = scmp.eq.s32.totalorder %s25, 1
    %p195 = por %p193, %p194
    %p197 = scmp.ne.s32.totalorder %s182, %s196
    %p198 = scmp.eq.s32.totalorder %s25, 0
    %p199 = por %p197, %p198
    %s201 = sadd.s32 %s200, 1
    %p204 = scmp.eq.s32.totalorder %s19, 1
    %p205 = scmp.ne.s32.totalorder %s200, %s202
    %p206 = scmp.eq.s32.totalorder %s19, 0
    %p207 = por %p205, %p206
    %p208 = scmp.ne.s32.totalorder %s200, %s202
    %p209 = scmp.eq.s32.totalorder %s24, 1
    %p210 = por %p208, %p209
    %p211 = scmp.ne.s32.totalorder %s202, %s203
    %p212 = scmp.eq.s32.totalorder %s24, 0
    %p213 = por %p211, %p212
    %p214 = scmp.ne.s32.totalorder %s202, %s203
    %p215 = scmp.eq.s32.totalorder %s25, 1
    %p216 = por %p214, %p215
    %p218 = scmp.ne.s32.totalorder %s203, %s217
    %p219 = scmp.eq.s32.totalorder %s25, 0
    %p220 = por %p218, %p219
    %s222 = sadd.s32 %s221, 1
    %p225 = scmp.eq.s32.totalorder %s19, 1
    %p226 = scmp.ne.s32.totalorder %s221, %s223
    %p227 = scmp.eq.s32.totalorder %s19, 0
    %p228 = por %p226, %p227
    %p229 = scmp.ne.s32.totalorder %s221, %s223
    %p230 = scmp.eq.s32.totalorder %s24, 1
    %p231 = por %p229, %p230
    %p232 = scmp.ne.s32.totalorder %s223, %s224
    %p233 = scmp.eq.s32.totalorder %s24, 0
    %p234 = por %p232, %p233
    %p235 = scmp.ne.s32.totalorder %s223, %s224
    %p236 = scmp.eq.s32.totalorder %s25, 1
    %p237 = por %p235, %p236
    %p239 = scmp.ne.s32.totalorder %s224, %s238
    %p240 = scmp.eq.s32.totalorder %s25, 0
    %p241 = por %p239, %p240
    %s243 = sadd.s32 %s242, 1
    %p246 = scmp.eq.s32.totalorder %s19, 1
    %p247 = scmp.ne.s32.totalorder %s242, %s244
    %p248 = scmp.eq.s32.totalorder %s19, 0
    %p249 = por %p247, %p248
    %p250 = scmp.ne.s32.totalorder %s242, %s244
    %p251 = scmp.eq.s32.totalorder %s24, 1
    %p252 = por %p250, %p251
    %p253 = scmp.ne.s32.totalorder %s244, %s245
    %p254 = scmp.eq.s32.totalorder %s24, 0
    %p255 = por %p253, %p254
    %p256 = scmp.ne.s32.totalorder %s244, %s245
    %p257 = scmp.eq.s32.totalorder %s25, 1
    %p258 = por %p256, %p257
    %p260 = scmp.ne.s32.totalorder %s245, %s259
    %p261 = scmp.eq.s32.totalorder %s25, 0
    %p262 = por %p260, %p261
    %s264 = sadd.s32 %s263, 1
    %p267 = scmp.eq.s32.totalorder %s19, 1
    %p268 = scmp.ne.s32.totalorder %s263, %s265
    %p269 = scmp.eq.s32.totalorder %s19, 0
    %p270 = por %p268, %p269
    %p271 = scmp.ne.s32.totalorder %s263, %s265
    %p272 = scmp.eq.s32.totalorder %s24, 1
    %p273 = por %p271, %p272
    %p274 = scmp.ne.s32.totalorder %s265, %s266
    %p275 = scmp.eq.s32.totalorder %s24, 0
    %p276 = por %p274, %p275
    %p277 = scmp.ne.s32.totalorder %s265, %s266
    %p278 = scmp.eq.s32.totalorder %s25, 1
    %p279 = por %p277, %p278
    %p281 = scmp.ne.s32.totalorder %s266, %s280
    %p282 = scmp.eq.s32.totalorder %s25, 0
    %p283 = por %p281, %p282
    %s285 = sadd.s32 %s284, 1
    %p288 = scmp.eq.s32.totalorder %s19, 1
    %p289 = scmp.ne.s32.totalorder %s284, %s286
    %p290 = scmp.eq.s32.totalorder %s19, 0
    %p291 = por %p289, %p290
    %p292 = scmp.ne.s32.totalorder %s284, %s286
    %p293 = scmp.eq.s32.totalorder %s24, 1
    %p294 = por %p292, %p293
    %p295 = scmp.ne.s32.totalorder %s286, %s287
    %p296 = scmp.eq.s32.totalorder %s24, 0
    %p297 = por %p295, %p296
    %p298 = scmp.ne.s32.totalorder %s286, %s287
    %p299 = scmp.eq.s32.totalorder %s25, 1
    %p300 = por %p298, %p299
    %p302 = scmp.ne.s32.totalorder %s287, %s301
    %p303 = scmp.eq.s32.totalorder %s25, 0
    %p304 = por %p302, %p303
    %s305 = ssub.s32 %s19, %s26
    %p306 = scmp.eq.s32.totalorder %s305, 0
    %s308 = sadd.s32 %s307, 1
    %s309 = scalar_select %p306, %s307, %s308
    %p312 = pneg %p306
    %p313 = scmp.eq.s32.totalorder %s19, 1
    %p314 = por %p312, %p313
    %p315 = scmp.ne.s32.totalorder %s307, %s310
    %p316 = scmp.eq.s32.totalorder %s19, 0
    %p317 = por %p315, %p316
    %p318 = scmp.ne.s32.totalorder %s307, %s310
    %p319 = scmp.eq.s32.totalorder %s24, 1
    %p320 = por %p318, %p319
    %p321 = scmp.ne.s32.totalorder %s310, %s311
    %p322 = scmp.eq.s32.totalorder %s24, 0
    %p323 = por %p321, %p322
    %p324 = scmp.ne.s32.totalorder %s310, %s311
    %p325 = scmp.eq.s32.totalorder %s25, 1
    %p326 = por %p324, %p325
    %p328 = scmp.ne.s32.totalorder %s311, %s327
    %p329 = scmp.eq.s32.totalorder %s25, 0
    %p330 = por %p328, %p329
    %p331 = scmp.le.s32.totalorder 1, %s19
    %p332 = scmp.lt.s32.totalorder %s19, 3
    %p333 = pnand %p331, %p332
    %p334 = pneg %p333
    // Predicated region
    $region9: #{mlp_forward.1} parent=5 // pred_check
      _
    $region10: #{mlp_forward.1} parent=5 // pred_check_branch
      %336 = sbr.rel (%p333) target = $region12
    $region11: #{mlp_forward.1} parent=5 // pred_region
      %s337 = ssub.s32 %s19, 1
      // Predicated region
      $region13: #{mlp_forward.1} parent=11 // pred_check
        %p338 = pneg %p66
      $region14: #{mlp_forward.1} parent=11 // pred_check_branch
        %340 = sbr.rel (%p338) target = $region16
      $region15: #{mlp_forward.1} parent=11 // pred_region
        _
      $region16: #{mlp_forward.1} parent=11 // pred_fallthru
        _
      // Predicated region
      $region17: #{mlp_forward.1} parent=11 // pred_check
        %p341 = pneg %p87
      $region18: #{mlp_forward.1} parent=11 // pred_check_branch
        %343 = sbr.rel (%p341) target = $region20
      $region19: #{mlp_forward.1} parent=11 // pred_region
        _
      $region20: #{mlp_forward.1} parent=11 // pred_fallthru
        _
      // Predicated region
      $region21: #{mlp_forward.1} parent=11 // pred_check
        %p344 = pneg %p108
      $region22: #{mlp_forward.1} parent=11 // pred_check_branch
        %346 = sbr.rel (%p344) target = $region24
      $region23: #{mlp_forward.1} parent=11 // pred_region
        _
      $region24: #{mlp_forward.1} parent=11 // pred_fallthru
        _
      // Predicated region
      $region25: #{mlp_forward.1} parent=11 // pred_check
        %p347 = pneg %p129
      $region26: #{mlp_forward.1} parent=11 // pred_check_branch
        %349 = sbr.rel (%p347) target = $region28
      $region27: #{mlp_forward.1} parent=11 // pred_region
        _
      $region28: #{mlp_forward.1} parent=11 // pred_fallthru
        _
      // Predicated region
      $region29: #{mlp_forward.1} parent=11 // pred_check
        %p350 = pneg %p150
      $region30: #{mlp_forward.1} parent=11 // pred_check_branch
        %352 = sbr.rel (%p350) target = $region32
      $region31: #{mlp_forward.1} parent=11 // pred_region
        _
      $region32: #{mlp_forward.1} parent=11 // pred_fallthru
        _
      // Predicated region
      $region33: #{mlp_forward.1} parent=11 // pred_check
        %p353 = pneg %p171
      $region34: #{mlp_forward.1} parent=11 // pred_check_branch
        %355 = sbr.rel (%p353) target = $region36
      $region35: #{mlp_forward.1} parent=11 // pred_region
        _
      $region36: #{mlp_forward.1} parent=11 // pred_fallthru
        _
      // Predicated region
      $region37: #{mlp_forward.1} parent=11 // pred_check
        %p356 = pneg %p192
      $region38: #{mlp_forward.1} parent=11 // pred_check_branch
        %358 = sbr.rel (%p356) target = $region40
      $region39: #{mlp_forward.1} parent=11 // pred_region
        _
      $region40: #{mlp_forward.1} parent=11 // pred_fallthru
        _
      // Predicated region
      $region41: #{mlp_forward.1} parent=11 // pred_check
        %p359 = pneg %p213
      $region42: #{mlp_forward.1} parent=11 // pred_check_branch
        %361 = sbr.rel (%p359) target = $region44
      $region43: #{mlp_forward.1} parent=11 // pred_region
        _
      $region44: #{mlp_forward.1} parent=11 // pred_fallthru
        _
      // Predicated region
      $region45: #{mlp_forward.1} parent=11 // pred_check
        %p362 = pneg %p234
      $region46: #{mlp_forward.1} parent=11 // pred_check_branch
        %364 = sbr.rel (%p362) target = $region48
      $region47: #{mlp_forward.1} parent=11 // pred_region
        _
      $region48: #{mlp_forward.1} parent=11 // pred_fallthru
        _
      // Predicated region
      $region49: #{mlp_forward.1} parent=11 // pred_check
        %p365 = pneg %p255
      $region50: #{mlp_forward.1} parent=11 // pred_check_branch
        %367 = sbr.rel (%p365) target = $region52
      $region51: #{mlp_forward.1} parent=11 // pred_region
        _
      $region52: #{mlp_forward.1} parent=11 // pred_fallthru
        _
      // Predicated region
      $region53: #{mlp_forward.1} parent=11 // pred_check
        %p368 = pneg %p276
      $region54: #{mlp_forward.1} parent=11 // pred_check_branch
        %370 = sbr.rel (%p368) target = $region56
      $region55: #{mlp_forward.1} parent=11 // pred_region
        _
      $region56: #{mlp_forward.1} parent=11 // pred_fallthru
        _
      // Predicated region
      $region57: #{mlp_forward.1} parent=11 // pred_check
        %p371 = pneg %p297
      $region58: #{mlp_forward.1} parent=11 // pred_check_branch
        %373 = sbr.rel (%p371) target = $region60
      $region59: #{mlp_forward.1} parent=11 // pred_region
        _
      $region60: #{mlp_forward.1} parent=11 // pred_fallthru
        _
    $region12: #{mlp_forward.1} parent=5 // pred_fallthru
      _
    %p374 = scmp.lt.s32.totalorder %s19, 2
    // Predicated region
    $region61: #{mlp_forward.1} parent=5 // pred_check
      %p375 = pneg %p374
    $region62: #{mlp_forward.1} parent=5 // pred_check_branch
      %377 = sbr.rel (%p375) target = $region64
    $region63: #{mlp_forward.1} parent=5 // pred_region
      // Predicated region
      $region65: #{mlp_forward.1} parent=63 // pred_check
        %p378 = pneg %p39
      $region66: #{mlp_forward.1} parent=63 // pred_check_branch
        %380 = sbr.rel (%p378) target = $region68
      $region67: #{mlp_forward.1} parent=63 // pred_region
        %s381 = smul.u32 32, %s19
        %p382 = scmp.lt.s32.totalorder %s381, 63
        %s383 = scalar_select %p382, %s381, 63
        %s384 = smul.addr %s383, 8
        %s385 = scalar_lea.vmem %s0, %s384
        %s386 = smul.u32 32, %s19
      $region68: #{mlp_forward.1} parent=63 // pred_fallthru
        _
    $region64: #{mlp_forward.1} parent=5 // pred_fallthru
      _
    %p387 = scmp.le.s32.totalorder 1, %s19
    %p388 = scmp.lt.s32.totalorder %s19, 3
    %p389 = pnand %p387, %p388
    %p390 = pneg %p389
    // Predicated region
    $region69: #{mlp_forward.1} parent=5 // pred_check
      _
    $region70: #{mlp_forward.1} parent=5 // pred_check_branch
      %392 = sbr.rel (%p389) target = $region72
    $region71: #{mlp_forward.1} parent=5 // pred_region
      %s393 = ssub.s32 %s19, 1
      %s394 = smul.u32 32, %s24
      %p395 = scmp.lt.s32.totalorder %s394, 63
      %s396 = scalar_select %p395, %s394, 63
      %s397 = smul.addr %s396, 8
      %s398 = scalar_lea.vmem %s0, %s397
      %p399 = pneg %p45
      %p400 = pneg %p42
      %p401 = pneg %p66
      %p402 = pneg %p63
      %p403 = pneg %p87
      %p404 = pneg %p84
      %p405 = pneg %p108
      %p406 = pneg %p105
      %p407 = pneg %p129
      %p408 = pneg %p126
      %p409 = pneg %p150
      %p410 = pneg %p147
      %p411 = pneg %p171
      %p412 = pneg %p168
      %p413 = pneg %p192
      %p414 = pneg %p189
      %p415 = pneg %p213
      %p416 = pneg %p210
      %p417 = pneg %p234
      %p418 = pneg %p231
      %p419 = pneg %p255
      %p420 = pneg %p252
      %p421 = pneg %p276
      %p422 = pneg %p273
      %p423 = pneg %p297
      %p424 = pneg %p294
      %p425 = pneg %p323
      %p426 = pneg %p320
      %s427 = smul.u32 32, %s24
      %p428 = scmp.lt.s32.totalorder %s427, 63
      %s429 = scalar_select %p428, %s427, 63
      %s430 = smul.addr %s429, 8
      %s431 = scalar_lea.vmem %s13, %s430
      %s432 = smul.u32 32, %s24
      %p433 = scmp.lt.s32.totalorder %s432, 63
      %s434 = scalar_select %p433, %s432, 63
      %s435 = smul.addr %s434, 8
      %s436 = scalar_lea.vmem %s0, %s435
      %s437 = smul.u32 32, %s24
      %s438 = smul.u32 32, %s24
      %p439 = scmp.lt.s32.totalorder %s438, 63
      %s440 = scalar_select %p439, %s438, 63
      %s441 = smul.addr %s440, 8
      %s442 = scalar_lea.vmem %s13, %s441
      %s443 = smul.u32 32, %s24
      %v444 = vld [vmem:[%s436] sm:$0xff]
      %v445 = vld [vmem:[%s436 + $0x8] sm:$0xff]
      %v446 = vld [vmem:[%s436 + $0x10] sm:$0xff]
      %v447 = vld [vmem:[%s436 + $0x18] sm:$0xff]
      %v448 = vld [vmem:[%s436 + $0x20] sm:$0xff]
      %v449 = vld [vmem:[%s436 + $0x28] sm:$0xff]
      %v450 = vld [vmem:[%s436 + $0x30] sm:$0xff]
      %v451 = vld [vmem:[%s436 + $0x38] sm:$0xff]
      %v452 = vld [vmem:[%s436 + $0x40] sm:$0xff]
      %v453 = vld [vmem:[%s436 + $0x48] sm:$0xff]
      %v454 = vld [vmem:[%s436 + $0x50] sm:$0xff]
      %v455 = vld [vmem:[%s436 + $0x58] sm:$0xff]
      %v456 = vld [vmem:[%s436 + $0x60] sm:$0xff]
      %v457 = vld [vmem:[%s436 + $0x68] sm:$0xff]
      %v458 = vld [vmem:[%s436 + $0x70] sm:$0xff]
      %v459 = vld [vmem:[%s436 + $0x78] sm:$0xff]
      %v460 = vld [vmem:[%s436 + $0x80] sm:$0xff]
      %v461 = vld [vmem:[%s436 + $0x88] sm:$0xff]
      %v462 = vld [vmem:[%s436 + $0x90] sm:$0xff]
      %v463 = vld [vmem:[%s436 + $0x98] sm:$0xff]
      %v464 = vld [vmem:[%s436 + $0xa0] sm:$0xff]
      %v465 = vld [vmem:[%s436 + $0xa8] sm:$0xff]
      %v466 = vld [vmem:[%s436 + $0xb0] sm:$0xff]
      %v467 = vld [vmem:[%s436 + $0xb8] sm:$0xff]
      %v468 = vld [vmem:[%s436 + $0xc0] sm:$0xff]
      %v469 = vld [vmem:[%s436 + $0xc8] sm:$0xff]
      %v470 = vld [vmem:[%s436 + $0xd0] sm:$0xff]
      %v471 = vld [vmem:[%s436 + $0xd8] sm:$0xff]
      %v472 = vld [vmem:[%s436 + $0xe0] sm:$0xff]
      %v473 = vld [vmem:[%s436 + $0xe8] sm:$0xff]
      %v474 = vld [vmem:[%s436 + $0xf0] sm:$0xff]
      %v475 = vld [vmem:[%s436 + $0xf8] sm:$0xff]
      %v476 = vld [vmem:[%s1] sm:$0xff]
      %v477 = vld [vmem:[%s1 + $0x8] sm:$0xff]
      %v478 = vld [vmem:[%s1 + $0x10] sm:$0xff]
      %v479 = vld [vmem:[%s1 + $0x18] sm:$0xff]
      %v480 = vld [vmem:[%s1 + $0x20] sm:$0xff]
      %v481 = vld [vmem:[%s1 + $0x28] sm:$0xff]
      %v482 = vld [vmem:[%s1 + $0x30] sm:$0xff]
      %v483 = vld [vmem:[%s1 + $0x38] sm:$0xff]
      %v484 = vld [vmem:[%s1 + $0x40] sm:$0xff]
      %v485 = vld [vmem:[%s1 + $0x48] sm:$0xff]
      %v486 = vld [vmem:[%s1 + $0x50] sm:$0xff]
      %v487 = vld [vmem:[%s1 + $0x58] sm:$0xff]
      %v488 = vld [vmem:[%s1 + $0x60] sm:$0xff]
      %v489 = vld [vmem:[%s1 + $0x68] sm:$0xff]
      %v490 = vld [vmem:[%s1 + $0x70] sm:$0xff]
      %v491 = vld [vmem:[%s1 + $0x78] sm:$0xff]
      %v492 = vld [vmem:[%s2] sm:$0x1]
      %v494 = vlaneseq
      %v495 = vshrl.u32 %v494, 7
      %v496 = vsub.s32 0, %v495
      %v497 = vrot.slane %v492, %v496
      %499 = vmatprep.subr.mxu0 0.0
      %500 = vmatpush1.msra.mxu0 %v476
      %501 = vmatprep.subr.mxu0 0.0
      %502 = vmatpush1.msra.mxu0 %v477
      %503 = vmatprep.subr.mxu0 0.0
      %504 = vmatpush1.msra.mxu0 %v478
      %505 = vmatprep.subr.mxu0 0.0
      %506 = vmatpush1.msra.mxu0 %v479
      %507 = vmatprep.subr.mxu0 0.0
      %508 = vmatpush1.msra.mxu0 %v480
      %509 = vmatprep.subr.mxu0 0.0
      %510 = vmatpush1.msra.mxu0 %v481
      %511 = vmatprep.subr.mxu0 0.0
      %512 = vmatpush1.msra.mxu0 %v482
      %513 = vmatprep.subr.mxu0 0.0
      %514 = vmatpush1.msra.mxu0 %v483
      %515 = vmatprep.subr.mxu0 0.0
      %516 = vmatpush1.msra.mxu0 %v484
      %517 = vmatprep.subr.mxu0 0.0
      %518 = vmatpush1.msra.mxu0 %v485
      %519 = vmatprep.subr.mxu0 0.0
      %520 = vmatpush1.msra.mxu0 %v486
      %521 = vmatprep.subr.mxu0 0.0
      %522 = vmatpush1.msra.mxu0 %v487
      %523 = vmatprep.subr.mxu0 0.0
      %524 = vmatpush1.msra.mxu0 %v488
      %525 = vmatprep.subr.mxu0 0.0
      %526 = vmatpush1.msra.mxu0 %v489
      %527 = vmatprep.subr.mxu0 0.0
      %528 = vmatpush1.msra.mxu0 %v490
      %529 = vmatprep.subr.mxu0 0.0
      %530 = vmatpush1.msra.mxu0 %v491
      %531 = vmatprep.subr.mxu0 0.0
      %532 = vmatpush1.msra.mxu0 0.0
      %533 = vmatprep.subr.mxu0 0.0
      %534 = vmatpush1.msra.mxu0 0.0
      %535 = vmatprep.subr.mxu0 0.0
      %536 = vmatpush1.msra.mxu0 0.0
      %537 = vmatprep.subr.mxu0 0.0
      %538 = vmatpush1.msra.mxu0 0.0
      %539 = vmatprep.subr.mxu0 0.0
      %540 = vmatpush1.msra.mxu0 0.0
      %541 = vmatprep.subr.mxu0 0.0
      %542 = vmatpush1.msra.mxu0 0.0
      %543 = vmatprep.subr.mxu0 0.0
      %544 = vmatpush1.msra.mxu0 0.0
      %545 = vmatprep.subr.mxu0 0.0
      %546 = vmatpush1.msra.mxu0 0.0
      %547 = vmatprep.subr.mxu0 0.0
      %548 = vmatpush1.msra.mxu0 0.0
      %549 = vmatprep.subr.mxu0 0.0
      %550 = vmatpush1.msra.mxu0 0.0
      %551 = vmatprep.subr.mxu0 0.0
      %552 = vmatpush1.msra.mxu0 0.0
      %553 = vmatprep.subr.mxu0 0.0
      %554 = vmatpush1.msra.mxu0 0.0
      %555 = vmatprep.subr.mxu0 0.0
      %556 = vmatpush1.msra.mxu0 0.0
      %557 = vmatprep.subr.mxu0 0.0
      %558 = vmatpush1.msra.mxu0 0.0
      %559 = vmatprep.subr.mxu0 0.0
      %560 = vmatpush1.msra.mxu0 0.0
      %561 = vmatprep.subr.mxu0 0.0
      %562 = vmatpush1.msra.mxu0 0.0
      %563 = vmatprep.mubr.f32.mxu0 0.0
      %564 = vmatmul.mubr.f32.gmra.mrb[0].mxu0 %v444
      %v565 = vpop.f32.mrb[0].mxu0
      %v566 = vadd.f32 %v497, %v565
      %v567 = vpop.f32.mrb[0].mxu0
      %568 = vmatprep.mubr.f32.mxu0 0.0
      %569 = vmatmul.mubr.f32.gmra.mrb[0].mxu0 %v445
      %v570 = vpop.f32.mrb[0].mxu0
      %v571 = vadd.f32 %v497, %v570
      %v572 = vpop.f32.mrb[0].mxu0
      %573 = vmatprep.mubr.f32.mxu0 0.0
      %574 = vmatmul.mubr.f32.gmra.mrb[0].mxu0 %v446
      %v575 = vpop.f32.mrb[0].mxu0
      %v576 = vadd.f32 %v497, %v575
      %v577 = vpop.f32.mrb[0].mxu0
      %578 = vmatprep.mubr.f32.mxu0 0.0
      %579 = vmatmul.mubr.f32.gmra.mrb[0].mxu0 %v447
      %v580 = vpop.f32.mrb[0].mxu0
      %v581 = vadd.f32 %v497, %v580
      %v582 = vpop.f32.mrb[0].mxu0
      %583 = vmatprep.mubr.f32.mxu0 0.0
      %584 = vmatmul.mubr.f32.gmra.mrb[0].mxu0 %v448
      %v585 = vpop.f32.mrb[0].mxu0
      %v586 = vadd.f32 %v497, %v585
      %v587 = vpop.f32.mrb[0].mxu0
      %588 = vmatprep.mubr.f32.mxu0 0.0
      %589 = vmatmul.mubr.f32.gmra.mrb[0].mxu0 %v449
      %v590 = vpop.f32.mrb[0].mxu0
      %v591 = vadd.f32 %v497, %v590
      %v592 = vpop.f32.mrb[0].mxu0
      %593 = vmatprep.mubr.f32.mxu0 0.0
      %594 = vmatmul.mubr.f32.gmra.mrb[0].mxu0 %v450
      %v595 = vpop.f32.mrb[0].mxu0
      %v596 = vadd.f32 %v497, %v595
      %v597 = vpop.f32.mrb[0].mxu0
      %598 = vmatprep.mubr.f32.mxu0 0.0
      %599 = vmatmul.mubr.f32.gmra.mrb[0].mxu0 %v451
      %v600 = vpop.f32.mrb[0].mxu0
      %v601 = vadd.f32 %v497, %v600
      %v602 = vpop.f32.mrb[0].mxu0
      %603 = vmatprep.mubr.f32.mxu0 0.0
      %604 = vmatmul.mubr.f32.gmra.mrb[0].mxu0 %v452
      %v605 = vpop.f32.mrb[0].mxu0
      %v606 = vadd.f32 %v497, %v605
      %v607 = vpop.f32.mrb[0].mxu0
      %608 = vmatprep.mubr.f32.mxu0 0.0
      %609 = vmatmul.mubr.f32.gmra.mrb[0].mxu0 %v453
      %v610 = vpop.f32.mrb[0].mxu0
      %v611 = vadd.f32 %v497, %v610
      %v612 = vpop.f32.mrb[0].mxu0
      %613 = vmatprep.mubr.f32.mxu0 0.0
      %614 = vmatmul.mubr.f32.gmra.mrb[0].mxu0 %v454
      %v615 = vpop.f32.mrb[0].mxu0
      %v616 = vadd.f32 %v497, %v615
      %v617 = vpop.f32.mrb[0].mxu0
      %618 = vmatprep.mubr.f32.mxu0 0.0
      %619 = vmatmul.mubr.f32.gmra.mrb[0].mxu0 %v455
      %v620 = vpop.f32.mrb[0].mxu0
      %v621 = vadd.f32 %v497, %v620
      %v622 = vpop.f32.mrb[0].mxu0
      %623 = vmatprep.mubr.f32.mxu0 0.0
      %624 = vmatmul.mubr.f32.gmra.mrb[0].mxu0 %v456
      %v625 = vpop.f32.mrb[0].mxu0
      %v626 = vadd.f32 %v497, %v625
      %v627 = vpop.f32.mrb[0].mxu0
      %628 = vmatprep.mubr.f32.mxu0 0.0
      %629 = vmatmul.mubr.f32.gmra.mrb[0].mxu0 %v457
      %v630 = vpop.f32.mrb[0].mxu0
      %v631 = vadd.f32 %v497, %v630
      %v632 = vpop.f32.mrb[0].mxu0
      %633 = vmatprep.mubr.f32.mxu0 0.0
      %634 = vmatmul.mubr.f32.gmra.mrb[0].mxu0 %v458
      %v635 = vpop.f32.mrb[0].mxu0
      %v636 = vadd.f32 %v497, %v635
      %v637 = vpop.f32.mrb[0].mxu0
      %638 = vmatprep.mubr.f32.mxu0 0.0
      %639 = vmatmul.mubr.f32.gmra.mrb[0].mxu0 %v459
      %v640 = vpop.f32.mrb[0].mxu0
      %v641 = vadd.f32 %v497, %v640
      %v642 = vpop.f32.mrb[0].mxu0
      %643 = vmatprep.mubr.f32.mxu0 0.0
      %644 = vmatmul.mubr.f32.gmra.mrb[0].mxu0 %v460
      %v645 = vpop.f32.mrb[0].mxu0
      %v646 = vadd.f32 %v497, %v645
      %v647 = vpop.f32.mrb[0].mxu0
      %648 = vmatprep.mubr.f32.mxu0 0.0
      %649 = vmatmul.mubr.f32.gmra.mrb[0].mxu0 %v461
      %v650 = vpop.f32.mrb[0].mxu0
      %v651 = vadd.f32 %v497, %v650
      %v652 = vpop.f32.mrb[0].mxu0
      %653 = vmatprep.mubr.f32.mxu0 0.0
      %654 = vmatmul.mubr.f32.gmra.mrb[0].mxu0 %v462
      %v655 = vpop.f32.mrb[0].mxu0
      %v656 = vadd.f32 %v497, %v655
      %v657 = vpop.f32.mrb[0].mxu0
      %658 = vmatprep.mubr.f32.mxu0 0.0
      %659 = vmatmul.mubr.f32.gmra.mrb[0].mxu0 %v463
      %v660 = vpop.f32.mrb[0].mxu0
      %v661 = vadd.f32 %v497, %v660
      %v662 = vpop.f32.mrb[0].mxu0
      %663 = vmatprep.mubr.f32.mxu0 0.0
      %664 = vmatmul.mubr.f32.gmra.mrb[0].mxu0 %v464
      %v665 = vpop.f32.mrb[0].mxu0
      %v666 = vadd.f32 %v497, %v665
      %v667 = vpop.f32.mrb[0].mxu0
      %668 = vmatprep.mubr.f32.mxu0 0.0
      %669 = vmatmul.mubr.f32.gmra.mrb[0].mxu0 %v465
      %v670 = vpop.f32.mrb[0].mxu0
      %v671 = vadd.f32 %v497, %v670
      %v672 = vpop.f32.mrb[0].mxu0
      %673 = vmatprep.mubr.f32.mxu0 0.0
      %674 = vmatmul.mubr.f32.gmra.mrb[0].mxu0 %v466
      %v675 = vpop.f32.mrb[0].mxu0
      %v676 = vadd.f32 %v497, %v675
      %v677 = vpop.f32.mrb[0].mxu0
      %678 = vmatprep.mubr.f32.mxu0 0.0
      %679 = vmatmul.mubr.f32.gmra.mrb[0].mxu0 %v467
      %v680 = vpop.f32.mrb[0].mxu0
      %v681 = vadd.f32 %v497, %v680
      %v682 = vpop.f32.mrb[0].mxu0
      %683 = vmatprep.mubr.f32.mxu0 0.0
      %684 = vmatmul.mubr.f32.gmra.mrb[0].mxu0 %v468
      %v685 = vpop.f32.mrb[0].mxu0
      %v686 = vadd.f32 %v497, %v685
      %v687 = vpop.f32.mrb[0].mxu0
      %688 = vmatprep.mubr.f32.mxu0 0.0
      %689 = vmatmul.mubr.f32.gmra.mrb[0].mxu0 %v469
      %v690 = vpop.f32.mrb[0].mxu0
      %v691 = vadd.f32 %v497, %v690
      %v692 = vpop.f32.mrb[0].mxu0
      %693 = vmatprep.mubr.f32.mxu0 0.0
      %694 = vmatmul.mubr.f32.gmra.mrb[0].mxu0 %v470
      %v695 = vpop.f32.mrb[0].mxu0
      %v696 = vadd.f32 %v497, %v695
      %v697 = vpop.f32.mrb[0].mxu0
      %698 = vmatprep.mubr.f32.mxu0 0.0
      %699 = vmatmul.mubr.f32.gmra.mrb[0].mxu0 %v471
      %v700 = vpop.f32.mrb[0].mxu0
      %v701 = vadd.f32 %v497, %v700
      %v702 = vpop.f32.mrb[0].mxu0
      %703 = vmatprep.mubr.f32.mxu0 0.0
      %704 = vmatmul.mubr.f32.gmra.mrb[0].mxu0 %v472
      %v705 = vpop.f32.mrb[0].mxu0
      %v706 = vadd.f32 %v497, %v705
      %v707 = vpop.f32.mrb[0].mxu0
      %708 = vmatprep.mubr.f32.mxu0 0.0
      %709 = vmatmul.mubr.f32.gmra.mrb[0].mxu0 %v473
      %v710 = vpop.f32.mrb[0].mxu0
      %v711 = vadd.f32 %v497, %v710
      %v712 = vpop.f32.mrb[0].mxu0
      %713 = vmatprep.mubr.f32.mxu0 0.0
      %714 = vmatmul.mubr.f32.gmra.mrb[0].mxu0 %v474
      %v715 = vpop.f32.mrb[0].mxu0
      %v716 = vadd.f32 %v497, %v715
      %v717 = vpop.f32.mrb[0].mxu0
      %718 = vmatprep.mubr.f32.mxu0 0.0
      %719 = vmatmul.mubr.f32.gmra.mrb[0].mxu0 %v475
      %v720 = vpop.f32.mrb[0].mxu0
      %v721 = vadd.f32 %v497, %v720
      %v722 = vpop.f32.mrb[0].mxu0
      %723 = vdwg.mxu0
      %v724 = vmax.f32 %v566, 0.0
      %v725 = vmax.f32 %v571, 0.0
      %v726 = vmax.f32 %v576, 0.0
      %v727 = vmax.f32 %v581, 0.0
      %v728 = vmax.f32 %v586, 0.0
      %v729 = vmax.f32 %v591, 0.0
      %v730 = vmax.f32 %v596, 0.0
      %v731 = vmax.f32 %v601, 0.0
      %v732 = vmax.f32 %v606, 0.0
      %v733 = vmax.f32 %v611, 0.0
      %v734 = vmax.f32 %v616, 0.0
      %v735 = vmax.f32 %v621, 0.0
      %v736 = vmax.f32 %v626, 0.0
      %v737 = vmax.f32 %v631, 0.0
      %v738 = vmax.f32 %v636, 0.0
      %v739 = vmax.f32 %v641, 0.0
      %v740 = vmax.f32 %v646, 0.0
      %v741 = vmax.f32 %v651, 0.0
      %v742 = vmax.f32 %v656, 0.0
      %v743 = vmax.f32 %v661, 0.0
      %v744 = vmax.f32 %v666, 0.0
      %v745 = vmax.f32 %v671, 0.0
      %v746 = vmax.f32 %v676, 0.0
      %v747 = vmax.f32 %v681, 0.0
      %v748 = vmax.f32 %v686, 0.0
      %v749 = vmax.f32 %v691, 0.0
      %v750 = vmax.f32 %v696, 0.0
      %v751 = vmax.f32 %v701, 0.0
      %v752 = vmax.f32 %v706, 0.0
      %v753 = vmax.f32 %v711, 0.0
      %v754 = vmax.f32 %v716, 0.0
      %v755 = vmax.f32 %v721, 0.0
      %v756 = vld [vmem:[%s3] sm:$0xff]
      %v757 = vld [vmem:[%s3 + $0x8] sm:$0xff]
      %v758 = vld [vmem:[%s3 + $0x10] sm:$0xff]
      %v759 = vld [vmem:[%s3 + $0x18] sm:$0xff]
      %v760 = vld [vmem:[%s3 + $0x20] sm:$0xff]
      %v761 = vld [vmem:[%s3 + $0x28] sm:$0xff]
      %v762 = vld [vmem:[%s3 + $0x30] sm:$0xff]
      %v763 = vld [vmem:[%s3 + $0x38] sm:$0xff]
      %v764 = vld [vmem:[%s3 + $0x40] sm:$0xff]
      %v765 = vld [vmem:[%s3 + $0x48] sm:$0xff]
      %v766 = vld [vmem:[%s3 + $0x50] sm:$0xff]
      %v767 = vld [vmem:[%s3 + $0x58] sm:$0xff]
      %v768 = vld [vmem:[%s3 + $0x60] sm:$0xff]
      %v769 = vld [vmem:[%s3 + $0x68] sm:$0xff]
      %v770 = vld [vmem:[%s3 + $0x70] sm:$0xff]
      %v771 = vld [vmem:[%s3 + $0x78] sm:$0xff]
      %v772 = vld [vmem:[%s4] sm:$0x1]
      %v774 = vlaneseq
      %v775 = vshrl.u32 %v774, 7
      %v776 = vsub.s32 0, %v775
      %v777 = vrot.slane %v772, %v776
      %779 = vmatprep.subr.mxu0 0.0
      %780 = vmatpush1.msra.mxu0 %v756
      %781 = vmatprep.subr.mxu0 0.0
      %782 = vmatpush1.msra.mxu0 %v757
      %783 = vmatprep.subr.mxu0 0.0
      %784 = vmatpush1.msra.mxu0 %v758
      %785 = vmatprep.subr.mxu0 0.0
      %786 = vmatpush1.msra.mxu0 %v759
      %787 = vmatprep.subr.mxu0 0.0
      %788 = vmatpush1.msra.mxu0 %v760
      %789 = vmatprep.subr.mxu0 0.0
      %790 = vmatpush1.msra.mxu0 %v761
      %791 = vmatprep.subr.mxu0 0.0
      %792 = vmatpush1.msra.mxu0 %v762
      %793 = vmatprep.subr.mxu0 0.0
      %794 = vmatpush1.msra.mxu0 %v763
      %795 = vmatprep.subr.mxu0 0.0
      %796 = vmatpush1.msra.mxu0 %v764
      %797 = vmatprep.subr.mxu0 0.0
      %798 = vmatpush1.msra.mxu0 %v765
      %799 = vmatprep.subr.mxu0 0.0
      %800 = vmatpush1.msra.mxu0 %v766
      %801 = vmatprep.subr.mxu0 0.0
      %802 = vmatpush1.msra.mxu0 %v767
      %803 = vmatprep.subr.mxu0 0.0
      %804 = vmatpush1.msra.mxu0 %v768
      %805 = vmatprep.subr.mxu0 0.0
      %806 = vmatpush1.msra.mxu0 %v769
      %807 = vmatprep.subr.mxu0 0.0
      %808 = vmatpush1.msra.mxu0 %v770
      %809 = vmatprep.subr.mxu0 0.0
      %810 = vmatpush1.msra.mxu0 %v771
      %811 = vmatprep.subr.mxu0 0.0
      %812 = vmatpush1.msra.mxu0 0.0
      %813 = vmatprep.subr.mxu0 0.0
      %814 = vmatpush1.msra.mxu0 0.0
      %815 = vmatprep.subr.mxu0 0.0
      %816 = vmatpush1.msra.mxu0 0.0
      %817 = vmatprep.subr.mxu0 0.0
      %818 = vmatpush1.msra.mxu0 0.0
      %819 = vmatprep.subr.mxu0 0.0
      %820 = vmatpush1.msra.mxu0 0.0
      %821 = vmatprep.subr.mxu0 0.0
      %822 = vmatpush1.msra.mxu0 0.0
      %823 = vmatprep.subr.mxu0 0.0
      %824 = vmatpush1.msra.mxu0 0.0
      %825 = vmatprep.subr.mxu0 0.0
      %826 = vmatpush1.msra.mxu0 0.0
      %827 = vmatprep.subr.mxu0 0.0
      %828 = vmatpush1.msra.mxu0 0.0
      %829 = vmatprep.subr.mxu0 0.0
      %830 = vmatpush1.msra.mxu0 0.0
      %831 = vmatprep.subr.mxu0 0.0
      %832 = vmatpush1.msra.mxu0 0.0
      %833 = vmatprep.subr.mxu0 0.0
      %834 = vmatpush1.msra.mxu0 0.0
      %835 = vmatprep.subr.mxu0 0.0
      %836 = vmatpush1.msra.mxu0 0.0
      %837 = vmatprep.subr.mxu0 0.0
      %838 = vmatpush1.msra.mxu0 0.0
      %839 = vmatprep.subr.mxu0 0.0
      %840 = vmatpush1.msra.mxu0 0.0
      %841 = vmatprep.subr.mxu0 0.0
      %842 = vmatpush1.msra.mxu0 0.0
      %843 = vmatprep.mubr.f32.mxu0 0.0
      %844 = vmatmul.mubr.f32.gmra.mrb[0].mxu0 %v724
      %v845 = vpop.f32.mrb[0].mxu0
      %v846 = vadd.f32 %v777, %v845
      %v847 = vpop.f32.mrb[0].mxu0
      %848 = vmatprep.mubr.f32.mxu0 0.0
      %849 = vmatmul.mubr.f32.gmra.mrb[0].mxu0 %v725
      %v850 = vpop.f32.mrb[0].mxu0
      %v851 = vadd.f32 %v777, %v850
      %v852 = vpop.f32.mrb[0].mxu0
      %853 = vmatprep.mubr.f32.mxu0 0.0
      %854 = vmatmul.mubr.f32.gmra.mrb[0].mxu0 %v726
      %v855 = vpop.f32.mrb[0].mxu0
      %v856 = vadd.f32 %v777, %v855
      %v857 = vpop.f32.mrb[0].mxu0
      %858 = vmatprep.mubr.f32.mxu0 0.0
      %859 = vmatmul.mubr.f32.gmra.mrb[0].mxu0 %v727
      %v860 = vpop.f32.mrb[0].mxu0
      %v861 = vadd.f32 %v777, %v860
      %v862 = vpop.f32.mrb[0].mxu0
      %863 = vmatprep.mubr.f32.mxu0 0.0
      %864 = vmatmul.mubr.f32.gmra.mrb[0].mxu0 %v728
      %v865 = vpop.f32.mrb[0].mxu0
      %v866 = vadd.f32 %v777, %v865
      %v867 = vpop.f32.mrb[0].mxu0
      %868 = vmatprep.mubr.f32.mxu0 0.0
      %869 = vmatmul.mubr.f32.gmra.mrb[0].mxu0 %v729
      %v870 = vpop.f32.mrb[0].mxu0
      %v871 = vadd.f32 %v777, %v870
      %v872 = vpop.f32.mrb[0].mxu0
      %873 = vmatprep.mubr.f32.mxu0 0.0
      %874 = vmatmul.mubr.f32.gmra.mrb[0].mxu0 %v730
      %v875 = vpop.f32.mrb[0].mxu0
      %v876 = vadd.f32 %v777, %v875
      %v877 = vpop.f32.mrb[0].mxu0
      %878 = vmatprep.mubr.f32.mxu0 0.0
      %879 = vmatmul.mubr.f32.gmra.mrb[0].mxu0 %v731
      %v880 = vpop.f32.mrb[0].mxu0
      %v881 = vadd.f32 %v777, %v880
      %v882 = vpop.f32.mrb[0].mxu0
      %883 = vmatprep.mubr.f32.mxu0 0.0
      %884 = vmatmul.mubr.f32.gmra.mrb[0].mxu0 %v732
      %v885 = vpop.f32.mrb[0].mxu0
      %v886 = vadd.f32 %v777, %v885
      %v887 = vpop.f32.mrb[0].mxu0
      %888 = vmatprep.mubr.f32.mxu0 0.0
      %889 = vmatmul.mubr.f32.gmra.mrb[0].mxu0 %v733
      %v890 = vpop.f32.mrb[0].mxu0
      %v891 = vadd.f32 %v777, %v890
      %v892 = vpop.f32.mrb[0].mxu0
      %893 = vmatprep.mubr.f32.mxu0 0.0
      %894 = vmatmul.mubr.f32.gmra.mrb[0].mxu0 %v734
      %v895 = vpop.f32.mrb[0].mxu0
      %v896 = vadd.f32 %v777, %v895
      %v897 = vpop.f32.mrb[0].mxu0
      %898 = vmatprep.mubr.f32.mxu0 0.0
      %899 = vmatmul.mubr.f32.gmra.mrb[0].mxu0 %v735
      %v900 = vpop.f32.mrb[0].mxu0
      %v901 = vadd.f32 %v777, %v900
      %v902 = vpop.f32.mrb[0].mxu0
      %903 = vmatprep.mubr.f32.mxu0 0.0
      %904 = vmatmul.mubr.f32.gmra.mrb[0].mxu0 %v736
      %v905 = vpop.f32.mrb[0].mxu0
      %v906 = vadd.f32 %v777, %v905
      %v907 = vpop.f32.mrb[0].mxu0
      %908 = vmatprep.mubr.f32.mxu0 0.0
      %909 = vmatmul.mubr.f32.gmra.mrb[0].mxu0 %v737
      %v910 = vpop.f32.mrb[0].mxu0
      %v911 = vadd.f32 %v777, %v910
      %v912 = vpop.f32.mrb[0].mxu0
      %913 = vmatprep.mubr.f32.mxu0 0.0
      %914 = vmatmul.mubr.f32.gmra.mrb[0].mxu0 %v738
      %v915 = vpop.f32.mrb[0].mxu0
      %v916 = vadd.f32 %v777, %v915
      %v917 = vpop.f32.mrb[0].mxu0
      %918 = vmatprep.mubr.f32.mxu0 0.0
      %919 = vmatmul.mubr.f32.gmra.mrb[0].mxu0 %v739
      %v920 = vpop.f32.mrb[0].mxu0
      %v921 = vadd.f32 %v777, %v920
      %v922 = vpop.f32.mrb[0].mxu0
      %923 = vmatprep.mubr.f32.mxu0 0.0
      %924 = vmatmul.mubr.f32.gmra.mrb[0].mxu0 %v740
      %v925 = vpop.f32.mrb[0].mxu0
      %v926 = vadd.f32 %v777, %v925
      %v927 = vpop.f32.mrb[0].mxu0
      %928 = vmatprep.mubr.f32.mxu0 0.0
      %929 = vmatmul.mubr.f32.gmra.mrb[0].mxu0 %v741
      %v930 = vpop.f32.mrb[0].mxu0
      %v931 = vadd.f32 %v777, %v930
      %v932 = vpop.f32.mrb[0].mxu0
      %933 = vmatprep.mubr.f32.mxu0 0.0
      %934 = vmatmul.mubr.f32.gmra.mrb[0].mxu0 %v742
      %v935 = vpop.f32.mrb[0].mxu0
      %v936 = vadd.f32 %v777, %v935
      %v937 = vpop.f32.mrb[0].mxu0
      %938 = vmatprep.mubr.f32.mxu0 0.0
      %939 = vmatmul.mubr.f32.gmra.mrb[0].mxu0 %v743
      %v940 = vpop.f32.mrb[0].mxu0
      %v941 = vadd.f32 %v777, %v940
      %v942 = vpop.f32.mrb[0].mxu0
      %943 = vmatprep.mubr.f32.mxu0 0.0
      %944 = vmatmul.mubr.f32.gmra.mrb[0].mxu0 %v744
      %v945 = vpop.f32.mrb[0].mxu0
      %v946 = vadd.f32 %v777, %v945
      %v947 = vpop.f32.mrb[0].mxu0
      %948 = vmatprep.mubr.f32.mxu0 0.0
      %949 = vmatmul.mubr.f32.gmra.mrb[0].mxu0 %v745
      %v950 = vpop.f32.mrb[0].mxu0
      %v951 = vadd.f32 %v777, %v950
      %v952 = vpop.f32.mrb[0].mxu0
      %953 = vmatprep.mubr.f32.mxu0 0.0
      %954 = vmatmul.mubr.f32.gmra.mrb[0].mxu0 %v746
      %v955 = vpop.f32.mrb[0].mxu0
      %v956 = vadd.f32 %v777, %v955
      %v957 = vpop.f32.mrb[0].mxu0
      %958 = vmatprep.mubr.f32.mxu0 0.0
      %959 = vmatmul.mubr.f32.gmra.mrb[0].mxu0 %v747
      %v960 = vpop.f32.mrb[0].mxu0
      %v961 = vadd.f32 %v777, %v960
      %v962 = vpop.f32.mrb[0].mxu0
      %963 = vmatprep.mubr.f32.mxu0 0.0
      %964 = vmatmul.mubr.f32.gmra.mrb[0].mxu0 %v748
      %v965 = vpop.f32.mrb[0].mxu0
      %v966 = vadd.f32 %v777, %v965
      %v967 = vpop.f32.mrb[0].mxu0
      %968 = vmatprep.mubr.f32.mxu0 0.0
      %969 = vmatmul.mubr.f32.gmra.mrb[0].mxu0 %v749
      %v970 = vpop.f32.mrb[0].mxu0
      %v971 = vadd.f32 %v777, %v970
      %v972 = vpop.f32.mrb[0].mxu0
      %973 = vmatprep.mubr.f32.mxu0 0.0
      %974 = vmatmul.mubr.f32.gmra.mrb[0].mxu0 %v750
      %v975 = vpop.f32.mrb[0].mxu0
      %v976 = vadd.f32 %v777, %v975
      %v977 = vpop.f32.mrb[0].mxu0
      %978 = vmatprep.mubr.f32.mxu0 0.0
      %979 = vmatmul.mubr.f32.gmra.mrb[0].mxu0 %v751
      %v980 = vpop.f32.mrb[0].mxu0
      %v981 = vadd.f32 %v777, %v980
      %v982 = vpop.f32.mrb[0].mxu0
      %983 = vmatprep.mubr.f32.mxu0 0.0
      %984 = vmatmul.mubr.f32.gmra.mrb[0].mxu0 %v752
      %v985 = vpop.f32.mrb[0].mxu0
      %v986 = vadd.f32 %v777, %v985
      %v987 = vpop.f32.mrb[0].mxu0
      %988 = vmatprep.mubr.f32.mxu0 0.0
      %989 = vmatmul.mubr.f32.gmra.mrb[0].mxu0 %v753
      %v990 = vpop.f32.mrb[0].mxu0
      %v991 = vadd.f32 %v777, %v990
      %v992 = vpop.f32.mrb[0].mxu0
      %993 = vmatprep.mubr.f32.mxu0 0.0
      %994 = vmatmul.mubr.f32.gmra.mrb[0].mxu0 %v754
      %v995 = vpop.f32.mrb[0].mxu0
      %v996 = vadd.f32 %v777, %v995
      %v997 = vpop.f32.mrb[0].mxu0
      %998 = vmatprep.mubr.f32.mxu0 0.0
      %999 = vmatmul.mubr.f32.gmra.mrb[0].mxu0 %v755
      %v1000 = vpop.f32.mrb[0].mxu0
      %v1001 = vadd.f32 %v777, %v1000
      %v1002 = vpop.f32.mrb[0].mxu0
      %1003 = vdwg.mxu0
      %v1004 = vmax.f32 %v846, 0.0
      %v1005 = vmax.f32 %v851, 0.0
      %v1006 = vmax.f32 %v856, 0.0
      %v1007 = vmax.f32 %v861, 0.0
      %v1008 = vmax.f32 %v866, 0.0
      %v1009 = vmax.f32 %v871, 0.0
      %v1010 = vmax.f32 %v876, 0.0
      %v1011 = vmax.f32 %v881, 0.0
      %v1012 = vmax.f32 %v886, 0.0
      %v1013 = vmax.f32 %v891, 0.0
      %v1014 = vmax.f32 %v896, 0.0
      %v1015 = vmax.f32 %v901, 0.0
      %v1016 = vmax.f32 %v906, 0.0
      %v1017 = vmax.f32 %v911, 0.0
      %v1018 = vmax.f32 %v916, 0.0
      %v1019 = vmax.f32 %v921, 0.0
      %v1020 = vmax.f32 %v926, 0.0
      %v1021 = vmax.f32 %v931, 0.0
      %v1022 = vmax.f32 %v936, 0.0
      %v1023 = vmax.f32 %v941, 0.0
      %v1024 = vmax.f32 %v946, 0.0
      %v1025 = vmax.f32 %v951, 0.0
      %v1026 = vmax.f32 %v956, 0.0
      %v1027 = vmax.f32 %v961, 0.0
      %v1028 = vmax.f32 %v966, 0.0
      %v1029 = vmax.f32 %v971, 0.0
      %v1030 = vmax.f32 %v976, 0.0
      %v1031 = vmax.f32 %v981, 0.0
      %v1032 = vmax.f32 %v986, 0.0
      %v1033 = vmax.f32 %v991, 0.0
      %v1034 = vmax.f32 %v996, 0.0
      %v1035 = vmax.f32 %v1001, 0.0
      %v1036 = vld [vmem:[%s5] sm:$0xff]
      %v1037 = vld [vmem:[%s5 + $0x8] sm:$0xff]
      %v1038 = vld [vmem:[%s5 + $0x10] sm:$0xff]
      %v1039 = vld [vmem:[%s5 + $0x18] sm:$0xff]
      %v1040 = vld [vmem:[%s5 + $0x20] sm:$0xff]
      %v1041 = vld [vmem:[%s5 + $0x28] sm:$0xff]
      %v1042 = vld [vmem:[%s5 + $0x30] sm:$0xff]
      %v1043 = vld [vmem:[%s5 + $0x38] sm:$0xff]
      %v1044 = vld [vmem:[%s5 + $0x40] sm:$0xff]
      %v1045 = vld [vmem:[%s5 + $0x48] sm:$0xff]
      %v1046 = vld [vmem:[%s5 + $0x50] sm:$0xff]
      %v1047 = vld [vmem:[%s5 + $0x58] sm:$0xff]
      %v1048 = vld [vmem:[%s5 + $0x60] sm:$0xff]
      %v1049 = vld [vmem:[%s5 + $0x68] sm:$0xff]
      %v1050 = vld [vmem:[%s5 + $0x70] sm:$0xff]
      %v1051 = vld [vmem:[%s5 + $0x78] sm:$0xff]
      %v1052 = vld [vmem:[%s6] sm:$0x1]
      %v1054 = vlaneseq
      %v1055 = vshrl.u32 %v1054, 7
      %v1056 = vsub.s32 0, %v1055
      %v1057 = vrot.slane %v1052, %v1056
      %1059 = vmatprep.subr.mxu0 0.0
      %1060 = vmatpush1.msra.mxu0 %v1036
      %1061 = vmatprep.subr.mxu0 0.0
      %1062 = vmatpush1.msra.mxu0 %v1037
      %1063 = vmatprep.subr.mxu0 0.0
      %1064 = vmatpush1.msra.mxu0 %v1038
      %1065 = vmatprep.subr.mxu0 0.0
      %1066 = vmatpush1.msra.mxu0 %v1039
      %1067 = vmatprep.subr.mxu0 0.0
      %1068 = vmatpush1.msra.mxu0 %v1040
      %1069 = vmatprep.subr.mxu0 0.0
      %1070 = vmatpush1.msra.mxu0 %v1041
      %1071 = vmatprep.subr.mxu0 0.0
      %1072 = vmatpush1.msra.mxu0 %v1042
      %1073 = vmatprep.subr.mxu0 0.0
      %1074 = vmatpush1.msra.mxu0 %v1043
      %1075 = vmatprep.subr.mxu0 0.0
      %1076 = vmatpush1.msra.mxu0 %v1044
      %1077 = vmatprep.subr.mxu0 0.0
      %1078 = vmatpush1.msra.mxu0 %v1045
      %1079 = vmatprep.subr.mxu0 0.0
      %1080 = vmatpush1.msra.mxu0 %v1046
      %1081 = vmatprep.subr.mxu0 0.0
      %1082 = vmatpush1.msra.mxu0 %v1047
      %1083 = vmatprep.subr.mxu0 0.0
      %1084 = vmatpush1.msra.mxu0 %v1048
      %1085 = vmatprep.subr.mxu0 0.0
      %1086 = vmatpush1.msra.mxu0 %v1049
      %1087 = vmatprep.subr.mxu0 0.0
      %1088 = vmatpush1.msra.mxu0 %v1050
      %1089 = vmatprep.subr.mxu0 0.0
      %1090 = vmatpush1.msra.mxu0 %v1051
      %1091 = vmatprep.subr.mxu0 0.0
      %1092 = vmatpush1.msra.mxu0 0.0
      %1093 = vmatprep.subr.mxu0 0.0
      %1094 = vmatpush1.msra.mxu0 0.0
      %1095 = vmatprep.subr.mxu0 0.0
      %1096 = vmatpush1.msra.mxu0 0.0
      %1097 = vmatprep.subr.mxu0 0.0
      %1098 = vmatpush1.msra.mxu0 0.0
      %1099 = vmatprep.subr.mxu0 0.0
      %1100 = vmatpush1.msra.mxu0 0.0
      %1101 = vmatprep.subr.mxu0 0.0
      %1102 = vmatpush1.msra.mxu0 0.0
      %1103 = vmatprep.subr.mxu0 0.0
      %1104 = vmatpush1.msra.mxu0 0.0
      %1105 = vmatprep.subr.mxu0 0.0
      %1106 = vmatpush1.msra.mxu0 0.0
      %1107 = vmatprep.subr.mxu0 0.0
      %1108 = vmatpush1.msra.mxu0 0.0
      %1109 = vmatprep.subr.mxu0 0.0
      %1110 = vmatpush1.msra.mxu0 0.0
      %1111 = vmatprep.subr.mxu0 0.0
      %1112 = vmatpush1.msra.mxu0 0.0
      %1113 = vmatprep.subr.mxu0 0.0
      %1114 = vmatpush1.msra.mxu0 0.0
      %1115 = vmatprep.subr.mxu0 0.0
      %1116 = vmatpush1.msra.mxu0 0.0
      %1117 = vmatprep.subr.mxu0 0.0
      %1118 = vmatpush1.msra.mxu0 0.0
      %1119 = vmatprep.subr.mxu0 0.0
      %1120 = vmatpush1.msra.mxu0 0.0
      %1121 = vmatprep.subr.mxu0 0.0
      %1122 = vmatpush1.msra.mxu0 0.0
      %1123 = vmatprep.mubr.f32.mxu0 0.0
      %1124 = vmatmul.mubr.f32.gmra.mrb[0].mxu0 %v1004
      %v1125 = vpop.f32.mrb[0].mxu0
      %v1126 = vadd.f32 %v1057, %v1125
      %v1127 = vpop.f32.mrb[0].mxu0
      %1128 = vmatprep.mubr.f32.mxu0 0.0
      %1129 = vmatmul.mubr.f32.gmra.mrb[0].mxu0 %v1005
      %v1130 = vpop.f32.mrb[0].mxu0
      %v1131 = vadd.f32 %v1057, %v1130
      %v1132 = vpop.f32.mrb[0].mxu0
      %1133 = vmatprep.mubr.f32.mxu0 0.0
      %1134 = vmatmul.mubr.f32.gmra.mrb[0].mxu0 %v1006
      %v1135 = vpop.f32.mrb[0].mxu0
      %v1136 = vadd.f32 %v1057, %v1135
      %v1137 = vpop.f32.mrb[0].mxu0
      %1138 = vmatprep.mubr.f32.mxu0 0.0
      %1139 = vmatmul.mubr.f32.gmra.mrb[0].mxu0 %v1007
      %v1140 = vpop.f32.mrb[0].mxu0
      %v1141 = vadd.f32 %v1057, %v1140
      %v1142 = vpop.f32.mrb[0].mxu0
      %1143 = vmatprep.mubr.f32.mxu0 0.0
      %1144 = vmatmul.mubr.f32.gmra.mrb[0].mxu0 %v1008
      %v1145 = vpop.f32.mrb[0].mxu0
      %v1146 = vadd.f32 %v1057, %v1145
      %v1147 = vpop.f32.mrb[0].mxu0
      %1148 = vmatprep.mubr.f32.mxu0 0.0
      %1149 = vmatmul.mubr.f32.gmra.mrb[0].mxu0 %v1009
      %v1150 = vpop.f32.mrb[0].mxu0
      %v1151 = vadd.f32 %v1057, %v1150
      %v1152 = vpop.f32.mrb[0].mxu0
      %1153 = vmatprep.mubr.f32.mxu0 0.0
      %1154 = vmatmul.mubr.f32.gmra.mrb[0].mxu0 %v1010
      %v1155 = vpop.f32.mrb[0].mxu0
      %v1156 = vadd.f32 %v1057, %v1155
      %v1157 = vpop.f32.mrb[0].mxu0
      %1158 = vmatprep.mubr.f32.mxu0 0.0
      %1159 = vmatmul.mubr.f32.gmra.mrb[0].mxu0 %v1011
      %v1160 = vpop.f32.mrb[0].mxu0
      %v1161 = vadd.f32 %v1057, %v1160
      %v1162 = vpop.f32.mrb[0].mxu0
      %1163 = vmatprep.mubr.f32.mxu0 0.0
      %1164 = vmatmul.mubr.f32.gmra.mrb[0].mxu0 %v1012
      %v1165 = vpop.f32.mrb[0].mxu0
      %v1166 = vadd.f32 %v1057, %v1165
      %v1167 = vpop.f32.mrb[0].mxu0
      %1168 = vmatprep.mubr.f32.mxu0 0.0
      %1169 = vmatmul.mubr.f32.gmra.mrb[0].mxu0 %v1013
      %v1170 = vpop.f32.mrb[0].mxu0
      %v1171 = vadd.f32 %v1057, %v1170
      %v1172 = vpop.f32.mrb[0].mxu0
      %1173 = vmatprep.mubr.f32.mxu0 0.0
      %1174 = vmatmul.mubr.f32.gmra.mrb[0].mxu0 %v1014
      %v1175 = vpop.f32.mrb[0].mxu0
      %v1176 = vadd.f32 %v1057, %v1175
      %v1177 = vpop.f32.mrb[0].mxu0
      %1178 = vmatprep.mubr.f32.mxu0 0.0
      %1179 = vmatmul.mubr.f32.gmra.mrb[0].mxu0 %v1015
      %v1180 = vpop.f32.mrb[0].mxu0
      %v1181 = vadd.f32 %v1057, %v1180
      %v1182 = vpop.f32.mrb[0].mxu0
      %1183 = vmatprep.mubr.f32.mxu0 0.0
      %1184 = vmatmul.mubr.f32.gmra.mrb[0].mxu0 %v1016
      %v1185 = vpop.f32.mrb[0].mxu0
      %v1186 = vadd.f32 %v1057, %v1185
      %v1187 = vpop.f32.mrb[0].mxu0
      %1188 = vmatprep.mubr.f32.mxu0 0.0
      %1189 = vmatmul.mubr.f32.gmra.mrb[0].mxu0 %v1017
      %v1190 = vpop.f32.mrb[0].mxu0
      %v1191 = vadd.f32 %v1057, %v1190
      %v1192 = vpop.f32.mrb[0].mxu0
      %1193 = vmatprep.mubr.f32.mxu0 0.0
      %1194 = vmatmul.mubr.f32.gmra.mrb[0].mxu0 %v1018
      %v1195 = vpop.f32.mrb[0].mxu0
      %v1196 = vadd.f32 %v1057, %v1195
      %v1197 = vpop.f32.mrb[0].mxu0
      %1198 = vmatprep.mubr.f32.mxu0 0.0
      %1199 = vmatmul.mubr.f32.gmra.mrb[0].mxu0 %v1019
      %v1200 = vpop.f32.mrb[0].mxu0
      %v1201 = vadd.f32 %v1057, %v1200
      %v1202 = vpop.f32.mrb[0].mxu0
      %1203 = vmatprep.mubr.f32.mxu0 0.0
      %1204 = vmatmul.mubr.f32.gmra.mrb[0].mxu0 %v1020
      %v1205 = vpop.f32.mrb[0].mxu0
      %v1206 = vadd.f32 %v1057, %v1205
      %v1207 = vpop.f32.mrb[0].mxu0
      %1208 = vmatprep.mubr.f32.mxu0 0.0
      %1209 = vmatmul.mubr.f32.gmra.mrb[0].mxu0 %v1021
      %v1210 = vpop.f32.mrb[0].mxu0
      %v1211 = vadd.f32 %v1057, %v1210
      %v1212 = vpop.f32.mrb[0].mxu0
      %1213 = vmatprep.mubr.f32.mxu0 0.0
      %1214 = vmatmul.mubr.f32.gmra.mrb[0].mxu0 %v1022
      %v1215 = vpop.f32.mrb[0].mxu0
      %v1216 = vadd.f32 %v1057, %v1215
      %v1217 = vpop.f32.mrb[0].mxu0
      %1218 = vmatprep.mubr.f32.mxu0 0.0
      %1219 = vmatmul.mubr.f32.gmra.mrb[0].mxu0 %v1023
      %v1220 = vpop.f32.mrb[0].mxu0
      %v1221 = vadd.f32 %v1057, %v1220
      %v1222 = vpop.f32.mrb[0].mxu0
      %1223 = vmatprep.mubr.f32.mxu0 0.0
      %1224 = vmatmul.mubr.f32.gmra.mrb[0].mxu0 %v1024
      %v1225 = vpop.f32.mrb[0].mxu0
      %v1226 = vadd.f32 %v1057, %v1225
      %v1227 = vpop.f32.mrb[0].mxu0
      %1228 = vmatprep.mubr.f32.mxu0 0.0
      %1229 = vmatmul.mubr.f32.gmra.mrb[0].mxu0 %v1025
      %v1230 = vpop.f32.mrb[0].mxu0
      %v1231 = vadd.f32 %v1057, %v1230
      %v1232 = vpop.f32.mrb[0].mxu0
      %1233 = vmatprep.mubr.f32.mxu0 0.0
      %1234 = vmatmul.mubr.f32.gmra.mrb[0].mxu0 %v1026
      %v1235 = vpop.f32.mrb[0].mxu0
      %v1236 = vadd.f32 %v1057, %v1235
      %v1237 = vpop.f32.mrb[0].mxu0
      %1238 = vmatprep.mubr.f32.mxu0 0.0
      %1239 = vmatmul.mubr.f32.gmra.mrb[0].mxu0 %v1027
      %v1240 = vpop.f32.mrb[0].mxu0
      %v1241 = vadd.f32 %v1057, %v1240
      %v1242 = vpop.f32.mrb[0].mxu0
      %1243 = vmatprep.mubr.f32.mxu0 0.0
      %1244 = vmatmul.mubr.f32.gmra.mrb[0].mxu0 %v1028
      %v1245 = vpop.f32.mrb[0].mxu0
      %v1246 = vadd.f32 %v1057, %v1245
      %v1247 = vpop.f32.mrb[0].mxu0
      %1248 = vmatprep.mubr.f32.mxu0 0.0
      %1249 = vmatmul.mubr.f32.gmra.mrb[0].mxu0 %v1029
      %v1250 = vpop.f32.mrb[0].mxu0
      %v1251 = vadd.f32 %v1057, %v1250
      %v1252 = vpop.f32.mrb[0].mxu0
      %1253 = vmatprep.mubr.f32.mxu0 0.0
      %1254 = vmatmul.mubr.f32.gmra.mrb[0].mxu0 %v1030
      %v1255 = vpop.f32.mrb[0].mxu0
      %v1256 = vadd.f32 %v1057, %v1255
      %v1257 = vpop.f32.mrb[0].mxu0
      %1258 = vmatprep.mubr.f32.mxu0 0.0
      %1259 = vmatmul.mubr.f32.gmra.mrb[0].mxu0 %v1031
      %v1260 = vpop.f32.mrb[0].mxu0
      %v1261 = vadd.f32 %v1057, %v1260
      %v1262 = vpop.f32.mrb[0].mxu0
      %1263 = vmatprep.mubr.f32.mxu0 0.0
      %1264 = vmatmul.mubr.f32.gmra.mrb[0].mxu0 %v1032
      %v1265 = vpop.f32.mrb[0].mxu0
      %v1266 = vadd.f32 %v1057, %v1265
      %v1267 = vpop.f32.mrb[0].mxu0
      %1268 = vmatprep.mubr.f32.mxu0 0.0
      %1269 = vmatmul.mubr.f32.gmra.mrb[0].mxu0 %v1033
      %v1270 = vpop.f32.mrb[0].mxu0
      %v1271 = vadd.f32 %v1057, %v1270
      %v1272 = vpop.f32.mrb[0].mxu0
      %1273 = vmatprep.mubr.f32.mxu0 0.0
      %1274 = vmatmul.mubr.f32.gmra.mrb[0].mxu0 %v1034
      %v1275 = vpop.f32.mrb[0].mxu0
      %v1276 = vadd.f32 %v1057, %v1275
      %v1277 = vpop.f32.mrb[0].mxu0
      %1278 = vmatprep.mubr.f32.mxu0 0.0
      %1279 = vmatmul.mubr.f32.gmra.mrb[0].mxu0 %v1035
      %v1280 = vpop.f32.mrb[0].mxu0
      %v1281 = vadd.f32 %v1057, %v1280
      %v1282 = vpop.f32.mrb[0].mxu0
      %1283 = vdwg.mxu0
      %v1284 = vmax.f32 %v1126, 0.0
      %v1285 = vmax.f32 %v1131, 0.0
      %v1286 = vmax.f32 %v1136, 0.0
      %v1287 = vmax.f32 %v1141, 0.0
      %v1288 = vmax.f32 %v1146, 0.0
      %v1289 = vmax.f32 %v1151, 0.0
      %v1290 = vmax.f32 %v1156, 0.0
      %v1291 = vmax.f32 %v1161, 0.0
      %v1292 = vmax.f32 %v1166, 0.0
      %v1293 = vmax.f32 %v1171, 0.0
      %v1294 = vmax.f32 %v1176, 0.0
      %v1295 = vmax.f32 %v1181, 0.0
      %v1296 = vmax.f32 %v1186, 0.0
      %v1297 = vmax.f32 %v1191, 0.0
      %v1298 = vmax.f32 %v1196, 0.0
      %v1299 = vmax.f32 %v1201, 0.0
      %v1300 = vmax.f32 %v1206, 0.0
      %v1301 = vmax.f32 %v1211, 0.0
      %v1302 = vmax.f32 %v1216, 0.0
      %v1303 = vmax.f32 %v1221, 0.0
      %v1304 = vmax.f32 %v1226, 0.0
      %v1305 = vmax.f32 %v1231, 0.0
      %v1306 = vmax.f32 %v1236, 0.0
      %v1307 = vmax.f32 %v1241, 0.0
      %v1308 = vmax.f32 %v1246, 0.0
      %v1309 = vmax.f32 %v1251, 0.0
      %v1310 = vmax.f32 %v1256, 0.0
      %v1311 = vmax.f32 %v1261, 0.0
      %v1312 = vmax.f32 %v1266, 0.0
      %v1313 = vmax.f32 %v1271, 0.0
      %v1314 = vmax.f32 %v1276, 0.0
      %v1315 = vmax.f32 %v1281, 0.0
      %v1316 = vld [vmem:[%s7] sm:$0xff]
      %v1317 = vld [vmem:[%s7 + $0x8] sm:$0xff]
      %v1318 = vld [vmem:[%s7 + $0x10] sm:$0xff]
      %v1319 = vld [vmem:[%s7 + $0x18] sm:$0xff]
      %v1320 = vld [vmem:[%s7 + $0x20] sm:$0xff]
      %v1321 = vld [vmem:[%s7 + $0x28] sm:$0xff]
      %v1322 = vld [vmem:[%s7 + $0x30] sm:$0xff]
      %v1323 = vld [vmem:[%s7 + $0x38] sm:$0xff]
      %v1324 = vld [vmem:[%s7 + $0x40] sm:$0xff]
      %v1325 = vld [vmem:[%s7 + $0x48] sm:$0xff]
      %v1326 = vld [vmem:[%s7 + $0x50] sm:$0xff]
      %v1327 = vld [vmem:[%s7 + $0x58] sm:$0xff]
      %v1328 = vld [vmem:[%s7 + $0x60] sm:$0xff]
      %v1329 = vld [vmem:[%s7 + $0x68] sm:$0xff]
      %v1330 = vld [vmem:[%s7 + $0x70] sm:$0xff]
      %v1331 = vld [vmem:[%s7 + $0x78] sm:$0xff]
      %v1332 = vld [vmem:[%s8] sm:$0x1]
      %v1334 = vlaneseq
      %v1335 = vshrl.u32 %v1334, 7
      %v1336 = vsub.s32 0, %v1335
      %v1337 = vrot.slane %v1332, %v1336
      %1339 = vmatprep.subr.mxu0 0.0
      %1340 = vmatpush1.msra.mxu0 %v1316
      %1341 = vmatprep.subr.mxu0 0.0
      %1342 = vmatpush1.msra.mxu0 %v1317
      %1343 = vmatprep.subr.mxu0 0.0
      %1344 = vmatpush1.msra.mxu0 %v1318
      %1345 = vmatprep.subr.mxu0 0.0
      %1346 = vmatpush1.msra.mxu0 %v1319
      %1347 = vmatprep.subr.mxu0 0.0
      %1348 = vmatpush1.msra.mxu0 %v1320
      %1349 = vmatprep.subr.mxu0 0.0
      %1350 = vmatpush1.msra.mxu0 %v1321
      %1351 = vmatprep.subr.mxu0 0.0
      %1352 = vmatpush1.msra.mxu0 %v1322
      %1353 = vmatprep.subr.mxu0 0.0
      %1354 = vmatpush1.msra.mxu0 %v1323
      %1355 = vmatprep.subr.mxu0 0.0
      %1356 = vmatpush1.msra.mxu0 %v1324
      %1357 = vmatprep.subr.mxu0 0.0
      %1358 = vmatpush1.msra.mxu0 %v1325
      %1359 = vmatprep.subr.mxu0 0.0
      %1360 = vmatpush1.msra.mxu0 %v1326
      %1361 = vmatprep.subr.mxu0 0.0
      %1362 = vmatpush1.msra.mxu0 %v1327
      %1363 = vmatprep.subr.mxu0 0.0
      %1364 = vmatpush1.msra.mxu0 %v1328
      %1365 = vmatprep.subr.mxu0 0.0
      %1366 = vmatpush1.msra.mxu0 %v1329
      %1367 = vmatprep.subr.mxu0 0.0
      %1368 = vmatpush1.msra.mxu0 %v1330
      %1369 = vmatprep.subr.mxu0 0.0
      %1370 = vmatpush1.msra.mxu0 %v1331
      %1371 = vmatprep.subr.mxu0 0.0
      %1372 = vmatpush1.msra.mxu0 0.0
      %1373 = vmatprep.subr.mxu0 0.0
      %1374 = vmatpush1.msra.mxu0 0.0
      %1375 = vmatprep.subr.mxu0 0.0
      %1376 = vmatpush1.msra.mxu0 0.0
      %1377 = vmatprep.subr.mxu0 0.0
      %1378 = vmatpush1.msra.mxu0 0.0
      %1379 = vmatprep.subr.mxu0 0.0
      %1380 = vmatpush1.msra.mxu0 0.0
      %1381 = vmatprep.subr.mxu0 0.0
      %1382 = vmatpush1.msra.mxu0 0.0
      %1383 = vmatprep.subr.mxu0 0.0
      %1384 = vmatpush1.msra.mxu0 0.0
      %1385 = vmatprep.subr.mxu0 0.0
      %1386 = vmatpush1.msra.mxu0 0.0
      %1387 = vmatprep.subr.mxu0 0.0
      %1388 = vmatpush1.msra.mxu0 0.0
      %1389 = vmatprep.subr.mxu0 0.0
      %1390 = vmatpush1.msra.mxu0 0.0
      %1391 = vmatprep.subr.mxu0 0.0
      %1392 = vmatpush1.msra.mxu0 0.0
      %1393 = vmatprep.subr.mxu0 0.0
      %1394 = vmatpush1.msra.mxu0 0.0
      %1395 = vmatprep.subr.mxu0 0.0
      %1396 = vmatpush1.msra.mxu0 0.0
      %1397 = vmatprep.subr.mxu0 0.0
      %1398 = vmatpush1.msra.mxu0 0.0
      %1399 = vmatprep.subr.mxu0 0.0
      %1400 = vmatpush1.msra.mxu0 0.0
      %1401 = vmatprep.subr.mxu0 0.0
      %1402 = vmatpush1.msra.mxu0 0.0
      %1403 = vmatprep.mubr.f32.mxu0 0.0
      %1404 = vmatmul.mubr.f32.gmra.mrb[0].mxu0 %v1284
      %v1405 = vpop.f32.mrb[0].mxu0
      %v1406 = vadd.f32 %v1337, %v1405
      %v1407 = vpop.f32.mrb[0].mxu0
      %1408 = vmatprep.mubr.f32.mxu0 0.0
      %1409 = vmatmul.mubr.f32.gmra.mrb[0].mxu0 %v1285
      %v1410 = vpop.f32.mrb[0].mxu0
      %v1411 = vadd.f32 %v1337, %v1410
      %v1412 = vpop.f32.mrb[0].mxu0
      %1413 = vmatprep.mubr.f32.mxu0 0.0
      %1414 = vmatmul.mubr.f32.gmra.mrb[0].mxu0 %v1286
      %v1415 = vpop.f32.mrb[0].mxu0
      %v1416 = vadd.f32 %v1337, %v1415
      %v1417 = vpop.f32.mrb[0].mxu0
      %1418 = vmatprep.mubr.f32.mxu0 0.0
      %1419 = vmatmul.mubr.f32.gmra.mrb[0].mxu0 %v1287
      %v1420 = vpop.f32.mrb[0].mxu0
      %v1421 = vadd.f32 %v1337, %v1420
      %v1422 = vpop.f32.mrb[0].mxu0
      %1423 = vmatprep.mubr.f32.mxu0 0.0
      %1424 = vmatmul.mubr.f32.gmra.mrb[0].mxu0 %v1288
      %v1425 = vpop.f32.mrb[0].mxu0
      %v1426 = vadd.f32 %v1337, %v1425
      %v1427 = vpop.f32.mrb[0].mxu0
      %1428 = vmatprep.mubr.f32.mxu0 0.0
      %1429 = vmatmul.mubr.f32.gmra.mrb[0].mxu0 %v1289
      %v1430 = vpop.f32.mrb[0].mxu0
      %v1431 = vadd.f32 %v1337, %v1430
      %v1432 = vpop.f32.mrb[0].mxu0
      %1433 = vmatprep.mubr.f32.mxu0 0.0
      %1434 = vmatmul.mubr.f32.gmra.mrb[0].mxu0 %v1290
      %v1435 = vpop.f32.mrb[0].mxu0
      %v1436 = vadd.f32 %v1337, %v1435
      %v1437 = vpop.f32.mrb[0].mxu0
      %1438 = vmatprep.mubr.f32.mxu0 0.0
      %1439 = vmatmul.mubr.f32.gmra.mrb[0].mxu0 %v1291
      %v1440 = vpop.f32.mrb[0].mxu0
      %v1441 = vadd.f32 %v1337, %v1440
      %v1442 = vpop.f32.mrb[0].mxu0
      %1443 = vmatprep.mubr.f32.mxu0 0.0
      %1444 = vmatmul.mubr.f32.gmra.mrb[0].mxu0 %v1292
      %v1445 = vpop.f32.mrb[0].mxu0
      %v1446 = vadd.f32 %v1337, %v1445
      %v1447 = vpop.f32.mrb[0].mxu0
      %1448 = vmatprep.mubr.f32.mxu0 0.0
      %1449 = vmatmul.mubr.f32.gmra.mrb[0].mxu0 %v1293
      %v1450 = vpop.f32.mrb[0].mxu0
      %v1451 = vadd.f32 %v1337, %v1450
      %v1452 = vpop.f32.mrb[0].mxu0
      %1453 = vmatprep.mubr.f32.mxu0 0.0
      %1454 = vmatmul.mubr.f32.gmra.mrb[0].mxu0 %v1294
      %v1455 = vpop.f32.mrb[0].mxu0
      %v1456 = vadd.f32 %v1337, %v1455
      %v1457 = vpop.f32.mrb[0].mxu0
      %1458 = vmatprep.mubr.f32.mxu0 0.0
      %1459 = vmatmul.mubr.f32.gmra.mrb[0].mxu0 %v1295
      %v1460 = vpop.f32.mrb[0].mxu0
      %v1461 = vadd.f32 %v1337, %v1460
      %v1462 = vpop.f32.mrb[0].mxu0
      %1463 = vmatprep.mubr.f32.mxu0 0.0
      %1464 = vmatmul.mubr.f32.gmra.mrb[0].mxu0 %v1296
      %v1465 = vpop.f32.mrb[0].mxu0
      %v1466 = vadd.f32 %v1337, %v1465
      %v1467 = vpop.f32.mrb[0].mxu0
      %1468 = vmatprep.mubr.f32.mxu0 0.0
      %1469 = vmatmul.mubr.f32.gmra.mrb[0].mxu0 %v1297
      %v1470 = vpop.f32.mrb[0].mxu0
      %v1471 = vadd.f32 %v1337, %v1470
      %v1472 = vpop.f32.mrb[0].mxu0
      %1473 = vmatprep.mubr.f32.mxu0 0.0
      %1474 = vmatmul.mubr.f32.gmra.mrb[0].mxu0 %v1298
      %v1475 = vpop.f32.mrb[0].mxu0
      %v1476 = vadd.f32 %v1337, %v1475
      %v1477 = vpop.f32.mrb[0].mxu0
      %1478 = vmatprep.mubr.f32.mxu0 0.0
      %1479 = vmatmul.mubr.f32.gmra.mrb[0].mxu0 %v1299
      %v1480 = vpop.f32.mrb[0].mxu0
      %v1481 = vadd.f32 %v1337, %v1480
      %v1482 = vpop.f32.mrb[0].mxu0
      %1483 = vmatprep.mubr.f32.mxu0 0.0
      %1484 = vmatmul.mubr.f32.gmra.mrb[0].mxu0 %v1300
      %v1485 = vpop.f32.mrb[0].mxu0
      %v1486 = vadd.f32 %v1337, %v1485
      %v1487 = vpop.f32.mrb[0].mxu0
      %1488 = vmatprep.mubr.f32.mxu0 0.0
      %1489 = vmatmul.mubr.f32.gmra.mrb[0].mxu0 %v1301
      %v1490 = vpop.f32.mrb[0].mxu0
      %v1491 = vadd.f32 %v1337, %v1490
      %v1492 = vpop.f32.mrb[0].mxu0
      %1493 = vmatprep.mubr.f32.mxu0 0.0
      %1494 = vmatmul.mubr.f32.gmra.mrb[0].mxu0 %v1302
      %v1495 = vpop.f32.mrb[0].mxu0
      %v1496 = vadd.f32 %v1337, %v1495
      %v1497 = vpop.f32.mrb[0].mxu0
      %1498 = vmatprep.mubr.f32.mxu0 0.0
      %1499 = vmatmul.mubr.f32.gmra.mrb[0].mxu0 %v1303
      %v1500 = vpop.f32.mrb[0].mxu0
      %v1501 = vadd.f32 %v1337, %v1500
      %v1502 = vpop.f32.mrb[0].mxu0
      %1503 = vmatprep.mubr.f32.mxu0 0.0
      %1504 = vmatmul.mubr.f32.gmra.mrb[0].mxu0 %v1304
      %v1505 = vpop.f32.mrb[0].mxu0
      %v1506 = vadd.f32 %v1337, %v1505
      %v1507 = vpop.f32.mrb[0].mxu0
      %1508 = vmatprep.mubr.f32.mxu0 0.0
      %1509 = vmatmul.mubr.f32.gmra.mrb[0].mxu0 %v1305
      %v1510 = vpop.f32.mrb[0].mxu0
      %v1511 = vadd.f32 %v1337, %v1510
      %v1512 = vpop.f32.mrb[0].mxu0
      %1513 = vmatprep.mubr.f32.mxu0 0.0
      %1514 = vmatmul.mubr.f32.gmra.mrb[0].mxu0 %v1306
      %v1515 = vpop.f32.mrb[0].mxu0
      %v1516 = vadd.f32 %v1337, %v1515
      %v1517 = vpop.f32.mrb[0].mxu0
      %1518 = vmatprep.mubr.f32.mxu0 0.0
      %1519 = vmatmul.mubr.f32.gmra.mrb[0].mxu0 %v1307
      %v1520 = vpop.f32.mrb[0].mxu0
      %v1521 = vadd.f32 %v1337, %v1520
      %v1522 = vpop.f32.mrb[0].mxu0
      %1523 = vmatprep.mubr.f32.mxu0 0.0
      %1524 = vmatmul.mubr.f32.gmra.mrb[0].mxu0 %v1308
      %v1525 = vpop.f32.mrb[0].mxu0
      %v1526 = vadd.f32 %v1337, %v1525
      %v1527 = vpop.f32.mrb[0].mxu0
      %1528 = vmatprep.mubr.f32.mxu0 0.0
      %1529 = vmatmul.mubr.f32.gmra.mrb[0].mxu0 %v1309
      %v1530 = vpop.f32.mrb[0].mxu0
      %v1531 = vadd.f32 %v1337, %v1530
      %v1532 = vpop.f32.mrb[0].mxu0
      %1533 = vmatprep.mubr.f32.mxu0 0.0
      %1534 = vmatmul.mubr.f32.gmra.mrb[0].mxu0 %v1310
      %v1535 = vpop.f32.mrb[0].mxu0
      %v1536 = vadd.f32 %v1337, %v1535
      %v1537 = vpop.f32.mrb[0].mxu0
      %1538 = vmatprep.mubr.f32.mxu0 0.0
      %1539 = vmatmul.mubr.f32.gmra.mrb[0].mxu0 %v1311
      %v1540 = vpop.f32.mrb[0].mxu0
      %v1541 = vadd.f32 %v1337, %v1540
      %v1542 = vpop.f32.mrb[0].mxu0
      %1543 = vmatprep.mubr.f32.mxu0 0.0
      %1544 = vmatmul.mubr.f32.gmra.mrb[0].mxu0 %v1312
      %v1545 = vpop.f32.mrb[0].mxu0
      %v1546 = vadd.f32 %v1337, %v1545
      %v1547 = vpop.f32.mrb[0].mxu0
      %1548 = vmatprep.mubr.f32.mxu0 0.0
      %1549 = vmatmul.mubr.f32.gmra.mrb[0].mxu0 %v1313
      %v1550 = vpop.f32.mrb[0].mxu0
      %v1551 = vadd.f32 %v1337, %v1550
      %v1552 = vpop.f32.mrb[0].mxu0
      %1553 = vmatprep.mubr.f32.mxu0 0.0
      %1554 = vmatmul.mubr.f32.gmra.mrb[0].mxu0 %v1314
      %v1555 = vpop.f32.mrb[0].mxu0
      %v1556 = vadd.f32 %v1337, %v1555
      %v1557 = vpop.f32.mrb[0].mxu0
      %1558 = vmatprep.mubr.f32.mxu0 0.0
      %1559 = vmatmul.mubr.f32.gmra.mrb[0].mxu0 %v1315
      %v1560 = vpop.f32.mrb[0].mxu0
      %v1561 = vadd.f32 %v1337, %v1560
      %v1562 = vpop.f32.mrb[0].mxu0
      %1563 = vdwg.mxu0
      %v1564 = vmax.f32 %v1406, 0.0
      %v1565 = vmax.f32 %v1411, 0.0
      %v1566 = vmax.f32 %v1416, 0.0
      %v1567 = vmax.f32 %v1421, 0.0
      %v1568 = vmax.f32 %v1426, 0.0
      %v1569 = vmax.f32 %v1431, 0.0
      %v1570 = vmax.f32 %v1436, 0.0
      %v1571 = vmax.f32 %v1441, 0.0
      %v1572 = vmax.f32 %v1446, 0.0
      %v1573 = vmax.f32 %v1451, 0.0
      %v1574 = vmax.f32 %v1456, 0.0
      %v1575 = vmax.f32 %v1461, 0.0
      %v1576 = vmax.f32 %v1466, 0.0
      %v1577 = vmax.f32 %v1471, 0.0
      %v1578 = vmax.f32 %v1476, 0.0
      %v1579 = vmax.f32 %v1481, 0.0
      %v1580 = vmax.f32 %v1486, 0.0
      %v1581 = vmax.f32 %v1491, 0.0
      %v1582 = vmax.f32 %v1496, 0.0
      %v1583 = vmax.f32 %v1501, 0.0
      %v1584 = vmax.f32 %v1506, 0.0
      %v1585 = vmax.f32 %v1511, 0.0
      %v1586 = vmax.f32 %v1516, 0.0
      %v1587 = vmax.f32 %v1521, 0.0
      %v1588 = vmax.f32 %v1526, 0.0
      %v1589 = vmax.f32 %v1531, 0.0
      %v1590 = vmax.f32 %v1536, 0.0
      %v1591 = vmax.f32 %v1541, 0.0
      %v1592 = vmax.f32 %v1546, 0.0
      %v1593 = vmax.f32 %v1551, 0.0
      %v1594 = vmax.f32 %v1556, 0.0
      %v1595 = vmax.f32 %v1561, 0.0
      %v1596 = vld [vmem:[%s9] sm:$0xff]
      %v1597 = vld [vmem:[%s9 + $0x8] sm:$0xff]
      %v1598 = vld [vmem:[%s9 + $0x10] sm:$0xff]
      %v1599 = vld [vmem:[%s9 + $0x18] sm:$0xff]
      %v1600 = vld [vmem:[%s9 + $0x20] sm:$0xff]
      %v1601 = vld [vmem:[%s9 + $0x28] sm:$0xff]
      %v1602 = vld [vmem:[%s9 + $0x30] sm:$0xff]
      %v1603 = vld [vmem:[%s9 + $0x38] sm:$0xff]
      %v1604 = vld [vmem:[%s9 + $0x40] sm:$0xff]
      %v1605 = vld [vmem:[%s9 + $0x48] sm:$0xff]
      %v1606 = vld [vmem:[%s9 + $0x50] sm:$0xff]
      %v1607 = vld [vmem:[%s9 + $0x58] sm:$0xff]
      %v1608 = vld [vmem:[%s9 + $0x60] sm:$0xff]
      %v1609 = vld [vmem:[%s9 + $0x68] sm:$0xff]
      %v1610 = vld [vmem:[%s9 + $0x70] sm:$0xff]
      %v1611 = vld [vmem:[%s9 + $0x78] sm:$0xff]
      %v1612 = vld [vmem:[%s10] sm:$0x1]
      %v1614 = vlaneseq
      %v1615 = vshrl.u32 %v1614, 7
      %v1616 = vsub.s32 0, %v1615
      %v1617 = vrot.slane %v1612, %v1616
      %1619 = vmatprep.subr.mxu0 0.0
      %1620 = vmatpush1.msra.mxu0 %v1596
      %1621 = vmatprep.subr.mxu0 0.0
      %1622 = vmatpush1.msra.mxu0 %v1597
      %1623 = vmatprep.subr.mxu0 0.0
      %1624 = vmatpush1.msra.mxu0 %v1598
      %1625 = vmatprep.subr.mxu0 0.0
      %1626 = vmatpush1.msra.mxu0 %v1599
      %1627 = vmatprep.subr.mxu0 0.0
      %1628 = vmatpush1.msra.mxu0 %v1600
      %1629 = vmatprep.subr.mxu0 0.0
      %1630 = vmatpush1.msra.mxu0 %v1601
      %1631 = vmatprep.subr.mxu0 0.0
      %1632 = vmatpush1.msra.mxu0 %v1602
      %1633 = vmatprep.subr.mxu0 0.0
      %1634 = vmatpush1.msra.mxu0 %v1603
      %1635 = vmatprep.subr.mxu0 0.0
      %1636 = vmatpush1.msra.mxu0 %v1604
      %1637 = vmatprep.subr.mxu0 0.0
      %1638 = vmatpush1.msra.mxu0 %v1605
      %1639 = vmatprep.subr.mxu0 0.0
      %1640 = vmatpush1.msra.mxu0 %v1606
      %1641 = vmatprep.subr.mxu0 0.0
      %1642 = vmatpush1.msra.mxu0 %v1607
      %1643 = vmatprep.subr.mxu0 0.0
      %1644 = vmatpush1.msra.mxu0 %v1608
      %1645 = vmatprep.subr.mxu0 0.0
      %1646 = vmatpush1.msra.mxu0 %v1609
      %1647 = vmatprep.subr.mxu0 0.0
      %1648 = vmatpush1.msra.mxu0 %v1610
      %1649 = vmatprep.subr.mxu0 0.0
      %1650 = vmatpush1.msra.mxu0 %v1611
      %1651 = vmatprep.subr.mxu0 0.0
      %1652 = vmatpush1.msra.mxu0 0.0
      %1653 = vmatprep.subr.mxu0 0.0
      %1654 = vmatpush1.msra.mxu0 0.0
      %1655 = vmatprep.subr.mxu0 0.0
      %1656 = vmatpush1.msra.mxu0 0.0
      %1657 = vmatprep.subr.mxu0 0.0
      %1658 = vmatpush1.msra.mxu0 0.0
      %1659 = vmatprep.subr.mxu0 0.0
      %1660 = vmatpush1.msra.mxu0 0.0
      %1661 = vmatprep.subr.mxu0 0.0
      %1662 = vmatpush1.msra.mxu0 0.0
      %1663 = vmatprep.subr.mxu0 0.0
      %1664 = vmatpush1.msra.mxu0 0.0
      %1665 = vmatprep.subr.mxu0 0.0
      %1666 = vmatpush1.msra.mxu0 0.0
      %1667 = vmatprep.subr.mxu0 0.0
      %1668 = vmatpush1.msra.mxu0 0.0
      %1669 = vmatprep.subr.mxu0 0.0
      %1670 = vmatpush1.msra.mxu0 0.0
      %1671 = vmatprep.subr.mxu0 0.0
      %1672 = vmatpush1.msra.mxu0 0.0
      %1673 = vmatprep.subr.mxu0 0.0
      %1674 = vmatpush1.msra.mxu0 0.0
      %1675 = vmatprep.subr.mxu0 0.0
      %1676 = vmatpush1.msra.mxu0 0.0
      %1677 = vmatprep.subr.mxu0 0.0
      %1678 = vmatpush1.msra.mxu0 0.0
      %1679 = vmatprep.subr.mxu0 0.0
      %1680 = vmatpush1.msra.mxu0 0.0
      %1681 = vmatprep.subr.mxu0 0.0
      %1682 = vmatpush1.msra.mxu0 0.0
      %1683 = vmatprep.mubr.f32.mxu0 0.0
      %1684 = vmatmul.mubr.f32.gmra.mrb[0].mxu0 %v1564
      %v1685 = vpop.f32.mrb[0].mxu0
      %v1686 = vadd.f32 %v1617, %v1685
      %v1687 = vpop.f32.mrb[0].mxu0
      %1688 = vmatprep.mubr.f32.mxu0 0.0
      %1689 = vmatmul.mubr.f32.gmra.mrb[0].mxu0 %v1565
      %v1690 = vpop.f32.mrb[0].mxu0
      %v1691 = vadd.f32 %v1617, %v1690
      %v1692 = vpop.f32.mrb[0].mxu0
      %1693 = vmatprep.mubr.f32.mxu0 0.0
      %1694 = vmatmul.mubr.f32.gmra.mrb[0].mxu0 %v1566
      %v1695 = vpop.f32.mrb[0].mxu0
      %v1696 = vadd.f32 %v1617, %v1695
      %v1697 = vpop.f32.mrb[0].mxu0
      %1698 = vmatprep.mubr.f32.mxu0 0.0
      %1699 = vmatmul.mubr.f32.gmra.mrb[0].mxu0 %v1567
      %v1700 = vpop.f32.mrb[0].mxu0
      %v1701 = vadd.f32 %v1617, %v1700
      %v1702 = vpop.f32.mrb[0].mxu0
      %1703 = vmatprep.mubr.f32.mxu0 0.0
      %1704 = vmatmul.mubr.f32.gmra.mrb[0].mxu0 %v1568
      %v1705 = vpop.f32.mrb[0].mxu0
      %v1706 = vadd.f32 %v1617, %v1705
      %v1707 = vpop.f32.mrb[0].mxu0
      %1708 = vmatprep.mubr.f32.mxu0 0.0
      %1709 = vmatmul.mubr.f32.gmra.mrb[0].mxu0 %v1569
      %v1710 = vpop.f32.mrb[0].mxu0
      %v1711 = vadd.f32 %v1617, %v1710
      %v1712 = vpop.f32.mrb[0].mxu0
      %1713 = vmatprep.mubr.f32.mxu0 0.0
      %1714 = vmatmul.mubr.f32.gmra.mrb[0].mxu0 %v1570
      %v1715 = vpop.f32.mrb[0].mxu0
      %v1716 = vadd.f32 %v1617, %v1715
      %v1717 = vpop.f32.mrb[0].mxu0
      %1718 = vmatprep.mubr.f32.mxu0 0.0
      %1719 = vmatmul.mubr.f32.gmra.mrb[0].mxu0 %v1571
      %v1720 = vpop.f32.mrb[0].mxu0
      %v1721 = vadd.f32 %v1617, %v1720
      %v1722 = vpop.f32.mrb[0].mxu0
      %1723 = vmatprep.mubr.f32.mxu0 0.0
      %1724 = vmatmul.mubr.f32.gmra.mrb[0].mxu0 %v1572
      %v1725 = vpop.f32.mrb[0].mxu0
      %v1726 = vadd.f32 %v1617, %v1725
      %v1727 = vpop.f32.mrb[0].mxu0
      %1728 = vmatprep.mubr.f32.mxu0 0.0
      %1729 = vmatmul.mubr.f32.gmra.mrb[0].mxu0 %v1573
      %v1730 = vpop.f32.mrb[0].mxu0
      %v1731 = vadd.f32 %v1617, %v1730
      %v1732 = vpop.f32.mrb[0].mxu0
      %1733 = vmatprep.mubr.f32.mxu0 0.0
      %1734 = vmatmul.mubr.f32.gmra.mrb[0].mxu0 %v1574
      %v1735 = vpop.f32.mrb[0].mxu0
      %v1736 = vadd.f32 %v1617, %v1735
      %v1737 = vpop.f32.mrb[0].mxu0
      %1738 = vmatprep.mubr.f32.mxu0 0.0
      %1739 = vmatmul.mubr.f32.gmra.mrb[0].mxu0 %v1575
      %v1740 = vpop.f32.mrb[0].mxu0
      %v1741 = vadd.f32 %v1617, %v1740
      %v1742 = vpop.f32.mrb[0].mxu0
      %1743 = vmatprep.mubr.f32.mxu0 0.0
      %1744 = vmatmul.mubr.f32.gmra.mrb[0].mxu0 %v1576
      %v1745 = vpop.f32.mrb[0].mxu0
      %v1746 = vadd.f32 %v1617, %v1745
      %v1747 = vpop.f32.mrb[0].mxu0
      %1748 = vmatprep.mubr.f32.mxu0 0.0
      %1749 = vmatmul.mubr.f32.gmra.mrb[0].mxu0 %v1577
      %v1750 = vpop.f32.mrb[0].mxu0
      %v1751 = vadd.f32 %v1617, %v1750
      %v1752 = vpop.f32.mrb[0].mxu0
      %1753 = vmatprep.mubr.f32.mxu0 0.0
      %1754 = vmatmul.mubr.f32.gmra.mrb[0].mxu0 %v1578
      %v1755 = vpop.f32.mrb[0].mxu0
      %v1756 = vadd.f32 %v1617, %v1755
      %v1757 = vpop.f32.mrb[0].mxu0
      %1758 = vmatprep.mubr.f32.mxu0 0.0
      %1759 = vmatmul.mubr.f32.gmra.mrb[0].mxu0 %v1579
      %v1760 = vpop.f32.mrb[0].mxu0
      %v1761 = vadd.f32 %v1617, %v1760
      %v1762 = vpop.f32.mrb[0].mxu0
      %1763 = vmatprep.mubr.f32.mxu0 0.0
      %1764 = vmatmul.mubr.f32.gmra.mrb[0].mxu0 %v1580
      %v1765 = vpop.f32.mrb[0].mxu0
      %v1766 = vadd.f32 %v1617, %v1765
      %v1767 = vpop.f32.mrb[0].mxu0
      %1768 = vmatprep.mubr.f32.mxu0 0.0
      %1769 = vmatmul.mubr.f32.gmra.mrb[0].mxu0 %v1581
      %v1770 = vpop.f32.mrb[0].mxu0
      %v1771 = vadd.f32 %v1617, %v1770
      %v1772 = vpop.f32.mrb[0].mxu0
      %1773 = vmatprep.mubr.f32.mxu0 0.0
      %1774 = vmatmul.mubr.f32.gmra.mrb[0].mxu0 %v1582
      %v1775 = vpop.f32.mrb[0].mxu0
      %v1776 = vadd.f32 %v1617, %v1775
      %v1777 = vpop.f32.mrb[0].mxu0
      %1778 = vmatprep.mubr.f32.mxu0 0.0
      %1779 = vmatmul.mubr.f32.gmra.mrb[0].mxu0 %v1583
      %v1780 = vpop.f32.mrb[0].mxu0
      %v1781 = vadd.f32 %v1617, %v1780
      %v1782 = vpop.f32.mrb[0].mxu0
      %1783 = vmatprep.mubr.f32.mxu0 0.0
      %1784 = vmatmul.mubr.f32.gmra.mrb[0].mxu0 %v1584
      %v1785 = vpop.f32.mrb[0].mxu0
      %v1786 = vadd.f32 %v1617, %v1785
      %v1787 = vpop.f32.mrb[0].mxu0
      %1788 = vmatprep.mubr.f32.mxu0 0.0
      %1789 = vmatmul.mubr.f32.gmra.mrb[0].mxu0 %v1585
      %v1790 = vpop.f32.mrb[0].mxu0
      %v1791 = vadd.f32 %v1617, %v1790
      %v1792 = vpop.f32.mrb[0].mxu0
      %1793 = vmatprep.mubr.f32.mxu0 0.0
      %1794 = vmatmul.mubr.f32.gmra.mrb[0].mxu0 %v1586
      %v1795 = vpop.f32.mrb[0].mxu0
      %v1796 = vadd.f32 %v1617, %v1795
      %v1797 = vpop.f32.mrb[0].mxu0
      %1798 = vmatprep.mubr.f32.mxu0 0.0
      %1799 = vmatmul.mubr.f32.gmra.mrb[0].mxu0 %v1587
      %v1800 = vpop.f32.mrb[0].mxu0
      %v1801 = vadd.f32 %v1617, %v1800
      %v1802 = vpop.f32.mrb[0].mxu0
      %1803 = vmatprep.mubr.f32.mxu0 0.0
      %1804 = vmatmul.mubr.f32.gmra.mrb[0].mxu0 %v1588
      %v1805 = vpop.f32.mrb[0].mxu0
      %v1806 = vadd.f32 %v1617, %v1805
      %v1807 = vpop.f32.mrb[0].mxu0
      %1808 = vmatprep.mubr.f32.mxu0 0.0
      %1809 = vmatmul.mubr.f32.gmra.mrb[0].mxu0 %v1589
      %v1810 = vpop.f32.mrb[0].mxu0
      %v1811 = vadd.f32 %v1617, %v1810
      %v1812 = vpop.f32.mrb[0].mxu0
      %1813 = vmatprep.mubr.f32.mxu0 0.0
      %1814 = vmatmul.mubr.f32.gmra.mrb[0].mxu0 %v1590
      %v1815 = vpop.f32.mrb[0].mxu0
      %v1816 = vadd.f32 %v1617, %v1815
      %v1817 = vpop.f32.mrb[0].mxu0
      %1818 = vmatprep.mubr.f32.mxu0 0.0
      %1819 = vmatmul.mubr.f32.gmra.mrb[0].mxu0 %v1591
      %v1820 = vpop.f32.mrb[0].mxu0
      %v1821 = vadd.f32 %v1617, %v1820
      %v1822 = vpop.f32.mrb[0].mxu0
      %1823 = vmatprep.mubr.f32.mxu0 0.0
      %1824 = vmatmul.mubr.f32.gmra.mrb[0].mxu0 %v1592
      %v1825 = vpop.f32.mrb[0].mxu0
      %v1826 = vadd.f32 %v1617, %v1825
      %v1827 = vpop.f32.mrb[0].mxu0
      %1828 = vmatprep.mubr.f32.mxu0 0.0
      %1829 = vmatmul.mubr.f32.gmra.mrb[0].mxu0 %v1593
      %v1830 = vpop.f32.mrb[0].mxu0
      %v1831 = vadd.f32 %v1617, %v1830
      %v1832 = vpop.f32.mrb[0].mxu0
      %1833 = vmatprep.mubr.f32.mxu0 0.0
      %1834 = vmatmul.mubr.f32.gmra.mrb[0].mxu0 %v1594
      %v1835 = vpop.f32.mrb[0].mxu0
      %v1836 = vadd.f32 %v1617, %v1835
      %v1837 = vpop.f32.mrb[0].mxu0
      %1838 = vmatprep.mubr.f32.mxu0 0.0
      %1839 = vmatmul.mubr.f32.gmra.mrb[0].mxu0 %v1595
      %v1840 = vpop.f32.mrb[0].mxu0
      %v1841 = vadd.f32 %v1617, %v1840
      %v1842 = vpop.f32.mrb[0].mxu0
      %1843 = vdwg.mxu0
      %v1844 = vmax.f32 %v1686, 0.0
      %v1845 = vmax.f32 %v1691, 0.0
      %v1846 = vmax.f32 %v1696, 0.0
      %v1847 = vmax.f32 %v1701, 0.0
      %v1848 = vmax.f32 %v1706, 0.0
      %v1849 = vmax.f32 %v1711, 0.0
      %v1850 = vmax.f32 %v1716, 0.0
      %v1851 = vmax.f32 %v1721, 0.0
      %v1852 = vmax.f32 %v1726, 0.0
      %v1853 = vmax.f32 %v1731, 0.0
      %v1854 = vmax.f32 %v1736, 0.0
      %v1855 = vmax.f32 %v1741, 0.0
      %v1856 = vmax.f32 %v1746, 0.0
      %v1857 = vmax.f32 %v1751, 0.0
      %v1858 = vmax.f32 %v1756, 0.0
      %v1859 = vmax.f32 %v1761, 0.0
      %v1860 = vmax.f32 %v1766, 0.0
      %v1861 = vmax.f32 %v1771, 0.0
      %v1862 = vmax.f32 %v1776, 0.0
      %v1863 = vmax.f32 %v1781, 0.0
      %v1864 = vmax.f32 %v1786, 0.0
      %v1865 = vmax.f32 %v1791, 0.0
      %v1866 = vmax.f32 %v1796, 0.0
      %v1867 = vmax.f32 %v1801, 0.0
      %v1868 = vmax.f32 %v1806, 0.0
      %v1869 = vmax.f32 %v1811, 0.0
      %v1870 = vmax.f32 %v1816, 0.0
      %v1871 = vmax.f32 %v1821, 0.0
      %v1872 = vmax.f32 %v1826, 0.0
      %v1873 = vmax.f32 %v1831, 0.0
      %v1874 = vmax.f32 %v1836, 0.0
      %v1875 = vmax.f32 %v1841, 0.0
      %v1876 = vld [vmem:[%s11] sm:$0xff]
      %v1877 = vld [vmem:[%s11 + $0x8] sm:$0xff]
      %v1878 = vld [vmem:[%s11 + $0x10] sm:$0xff]
      %v1879 = vld [vmem:[%s11 + $0x18] sm:$0xff]
      %v1880 = vld [vmem:[%s11 + $0x20] sm:$0xff]
      %v1881 = vld [vmem:[%s11 + $0x28] sm:$0xff]
      %v1882 = vld [vmem:[%s11 + $0x30] sm:$0xff]
      %v1883 = vld [vmem:[%s11 + $0x38] sm:$0xff]
      %v1884 = vld [vmem:[%s11 + $0x40] sm:$0xff]
      %v1885 = vld [vmem:[%s11 + $0x48] sm:$0xff]
      %v1886 = vld [vmem:[%s11 + $0x50] sm:$0xff]
      %v1887 = vld [vmem:[%s11 + $0x58] sm:$0xff]
      %v1888 = vld [vmem:[%s11 + $0x60] sm:$0xff]
      %v1889 = vld [vmem:[%s11 + $0x68] sm:$0xff]
      %v1890 = vld [vmem:[%s11 + $0x70] sm:$0xff]
      %v1891 = vld [vmem:[%s11 + $0x78] sm:$0xff]
      %v1892 = vld [vmem:[%s12] sm:$0x1]
      %v1894 = vlaneseq
      %v1895 = vshrl.u32 %v1894, 7
      %v1896 = vsub.s32 0, %v1895
      %v1897 = vrot.slane %v1892, %v1896
      %1899 = vmatprep.subr.mxu0 0.0
      %1900 = vmatpush1.msra.mxu0 %v1876
      %1901 = vmatprep.subr.mxu0 0.0
      %1902 = vmatpush1.msra.mxu0 %v1877
      %1903 = vmatprep.subr.mxu0 0.0
      %1904 = vmatpush1.msra.mxu0 %v1878
      %1905 = vmatprep.subr.mxu0 0.0
      %1906 = vmatpush1.msra.mxu0 %v1879
      %1907 = vmatprep.subr.mxu0 0.0
      %1908 = vmatpush1.msra.mxu0 %v1880
      %1909 = vmatprep.subr.mxu0 0.0
      %1910 = vmatpush1.msra.mxu0 %v1881
      %1911 = vmatprep.subr.mxu0 0.0
      %1912 = vmatpush1.msra.mxu0 %v1882
      %1913 = vmatprep.subr.mxu0 0.0
      %1914 = vmatpush1.msra.mxu0 %v1883
      %1915 = vmatprep.subr.mxu0 0.0
      %1916 = vmatpush1.msra.mxu0 %v1884
      %1917 = vmatprep.subr.mxu0 0.0
      %1918 = vmatpush1.msra.mxu0 %v1885
      %1919 = vmatprep.subr.mxu0 0.0
      %1920 = vmatpush1.msra.mxu0 %v1886
      %1921 = vmatprep.subr.mxu0 0.0
      %1922 = vmatpush1.msra.mxu0 %v1887
      %1923 = vmatprep.subr.mxu0 0.0
      %1924 = vmatpush1.msra.mxu0 %v1888
      %1925 = vmatprep.subr.mxu0 0.0
      %1926 = vmatpush1.msra.mxu0 %v1889
      %1927 = vmatprep.subr.mxu0 0.0
      %1928 = vmatpush1.msra.mxu0 %v1890
      %1929 = vmatprep.subr.mxu0 0.0
      %1930 = vmatpush1.msra.mxu0 %v1891
      %1931 = vmatprep.subr.mxu0 0.0
      %1932 = vmatpush1.msra.mxu0 0.0
      %1933 = vmatprep.subr.mxu0 0.0
      %1934 = vmatpush1.msra.mxu0 0.0
      %1935 = vmatprep.subr.mxu0 0.0
      %1936 = vmatpush1.msra.mxu0 0.0
      %1937 = vmatprep.subr.mxu0 0.0
      %1938 = vmatpush1.msra.mxu0 0.0
      %1939 = vmatprep.subr.mxu0 0.0
      %1940 = vmatpush1.msra.mxu0 0.0
      %1941 = vmatprep.subr.mxu0 0.0
      %1942 = vmatpush1.msra.mxu0 0.0
      %1943 = vmatprep.subr.mxu0 0.0
      %1944 = vmatpush1.msra.mxu0 0.0
      %1945 = vmatprep.subr.mxu0 0.0
      %1946 = vmatpush1.msra.mxu0 0.0
      %1947 = vmatprep.subr.mxu0 0.0
      %1948 = vmatpush1.msra.mxu0 0.0
      %1949 = vmatprep.subr.mxu0 0.0
      %1950 = vmatpush1.msra.mxu0 0.0
      %1951 = vmatprep.subr.mxu0 0.0
      %1952 = vmatpush1.msra.mxu0 0.0
      %1953 = vmatprep.subr.mxu0 0.0
      %1954 = vmatpush1.msra.mxu0 0.0
      %1955 = vmatprep.subr.mxu0 0.0
      %1956 = vmatpush1.msra.mxu0 0.0
      %1957 = vmatprep.subr.mxu0 0.0
      %1958 = vmatpush1.msra.mxu0 0.0
      %1959 = vmatprep.subr.mxu0 0.0
      %1960 = vmatpush1.msra.mxu0 0.0
      %1961 = vmatprep.subr.mxu0 0.0
      %1962 = vmatpush1.msra.mxu0 0.0
      %1963 = vmatprep.mubr.f32.mxu0 0.0
      %1964 = vmatmul.mubr.f32.gmra.mrb[0].mxu0 %v1844
      %v1965 = vpop.f32.mrb[0].mxu0
      %v1966 = vadd.f32 %v1897, %v1965
      %v1967 = vpop.f32.mrb[0].mxu0
      %1968 = vmatprep.mubr.f32.mxu0 0.0
      %1969 = vmatmul.mubr.f32.gmra.mrb[0].mxu0 %v1845
      %v1970 = vpop.f32.mrb[0].mxu0
      %v1971 = vadd.f32 %v1897, %v1970
      %v1972 = vpop.f32.mrb[0].mxu0
      %1973 = vmatprep.mubr.f32.mxu0 0.0
      %1974 = vmatmul.mubr.f32.gmra.mrb[0].mxu0 %v1846
      %v1975 = vpop.f32.mrb[0].mxu0
      %v1976 = vadd.f32 %v1897, %v1975
      %v1977 = vpop.f32.mrb[0].mxu0
      %1978 = vmatprep.mubr.f32.mxu0 0.0
      %1979 = vmatmul.mubr.f32.gmra.mrb[0].mxu0 %v1847
      %v1980 = vpop.f32.mrb[0].mxu0
      %v1981 = vadd.f32 %v1897, %v1980
      %v1982 = vpop.f32.mrb[0].mxu0
      %1983 = vmatprep.mubr.f32.mxu0 0.0
      %1984 = vmatmul.mubr.f32.gmra.mrb[0].mxu0 %v1848
      %v1985 = vpop.f32.mrb[0].mxu0
      %v1986 = vadd.f32 %v1897, %v1985
      %v1987 = vpop.f32.mrb[0].mxu0
      %1988 = vmatprep.mubr.f32.mxu0 0.0
      %1989 = vmatmul.mubr.f32.gmra.mrb[0].mxu0 %v1849
      %v1990 = vpop.f32.mrb[0].mxu0
      %v1991 = vadd.f32 %v1897, %v1990
      %v1992 = vpop.f32.mrb[0].mxu0
      %1993 = vmatprep.mubr.f32.mxu0 0.0
      %1994 = vmatmul.mubr.f32.gmra.mrb[0].mxu0 %v1850
      %v1995 = vpop.f32.mrb[0].mxu0
      %v1996 = vadd.f32 %v1897, %v1995
      %v1997 = vpop.f32.mrb[0].mxu0
      %1998 = vmatprep.mubr.f32.mxu0 0.0
      %1999 = vmatmul.mubr.f32.gmra.mrb[0].mxu0 %v1851
      %v2000 = vpop.f32.mrb[0].mxu0
      %v2001 = vadd.f32 %v1897, %v2000
      %v2002 = vpop.f32.mrb[0].mxu0
      %2003 = vmatprep.mubr.f32.mxu0 0.0
      %2004 = vmatmul.mubr.f32.gmra.mrb[0].mxu0 %v1852
      %v2005 = vpop.f32.mrb[0].mxu0
      %v2006 = vadd.f32 %v1897, %v2005
      %v2007 = vpop.f32.mrb[0].mxu0
      %2008 = vmatprep.mubr.f32.mxu0 0.0
      %2009 = vmatmul.mubr.f32.gmra.mrb[0].mxu0 %v1853
      %v2010 = vpop.f32.mrb[0].mxu0
      %v2011 = vadd.f32 %v1897, %v2010
      %v2012 = vpop.f32.mrb[0].mxu0
      %2013 = vmatprep.mubr.f32.mxu0 0.0
      %2014 = vmatmul.mubr.f32.gmra.mrb[0].mxu0 %v1854
      %v2015 = vpop.f32.mrb[0].mxu0
      %v2016 = vadd.f32 %v1897, %v2015
      %v2017 = vpop.f32.mrb[0].mxu0
      %2018 = vmatprep.mubr.f32.mxu0 0.0
      %2019 = vmatmul.mubr.f32.gmra.mrb[0].mxu0 %v1855
      %v2020 = vpop.f32.mrb[0].mxu0
      %v2021 = vadd.f32 %v1897, %v2020
      %v2022 = vpop.f32.mrb[0].mxu0
      %2023 = vmatprep.mubr.f32.mxu0 0.0
      %2024 = vmatmul.mubr.f32.gmra.mrb[0].mxu0 %v1856
      %v2025 = vpop.f32.mrb[0].mxu0
      %v2026 = vadd.f32 %v1897, %v2025
      %v2027 = vpop.f32.mrb[0].mxu0
      %2028 = vmatprep.mubr.f32.mxu0 0.0
      %2029 = vmatmul.mubr.f32.gmra.mrb[0].mxu0 %v1857
      %v2030 = vpop.f32.mrb[0].mxu0
      %v2031 = vadd.f32 %v1897, %v2030
      %v2032 = vpop.f32.mrb[0].mxu0
      %2033 = vmatprep.mubr.f32.mxu0 0.0
      %2034 = vmatmul.mubr.f32.gmra.mrb[0].mxu0 %v1858
      %v2035 = vpop.f32.mrb[0].mxu0
      %v2036 = vadd.f32 %v1897, %v2035
      %v2037 = vpop.f32.mrb[0].mxu0
      %2038 = vmatprep.mubr.f32.mxu0 0.0
      %2039 = vmatmul.mubr.f32.gmra.mrb[0].mxu0 %v1859
      %v2040 = vpop.f32.mrb[0].mxu0
      %v2041 = vadd.f32 %v1897, %v2040
      %v2042 = vpop.f32.mrb[0].mxu0
      %2043 = vmatprep.mubr.f32.mxu0 0.0
      %2044 = vmatmul.mubr.f32.gmra.mrb[0].mxu0 %v1860
      %v2045 = vpop.f32.mrb[0].mxu0
      %v2046 = vadd.f32 %v1897, %v2045
      %v2047 = vpop.f32.mrb[0].mxu0
      %2048 = vmatprep.mubr.f32.mxu0 0.0
      %2049 = vmatmul.mubr.f32.gmra.mrb[0].mxu0 %v1861
      %v2050 = vpop.f32.mrb[0].mxu0
      %v2051 = vadd.f32 %v1897, %v2050
      %v2052 = vpop.f32.mrb[0].mxu0
      %2053 = vmatprep.mubr.f32.mxu0 0.0
      %2054 = vmatmul.mubr.f32.gmra.mrb[0].mxu0 %v1862
      %v2055 = vpop.f32.mrb[0].mxu0
      %v2056 = vadd.f32 %v1897, %v2055
      %v2057 = vpop.f32.mrb[0].mxu0
      %2058 = vmatprep.mubr.f32.mxu0 0.0
      %2059 = vmatmul.mubr.f32.gmra.mrb[0].mxu0 %v1863
      %v2060 = vpop.f32.mrb[0].mxu0
      %v2061 = vadd.f32 %v1897, %v2060
      %v2062 = vpop.f32.mrb[0].mxu0
      %2063 = vmatprep.mubr.f32.mxu0 0.0
      %2064 = vmatmul.mubr.f32.gmra.mrb[0].mxu0 %v1864
      %v2065 = vpop.f32.mrb[0].mxu0
      %v2066 = vadd.f32 %v1897, %v2065
      %v2067 = vpop.f32.mrb[0].mxu0
      %2068 = vmatprep.mubr.f32.mxu0 0.0
      %2069 = vmatmul.mubr.f32.gmra.mrb[0].mxu0 %v1865
      %v2070 = vpop.f32.mrb[0].mxu0
      %v2071 = vadd.f32 %v1897, %v2070
      %v2072 = vpop.f32.mrb[0].mxu0
      %2073 = vmatprep.mubr.f32.mxu0 0.0
      %2074 = vmatmul.mubr.f32.gmra.mrb[0].mxu0 %v1866
      %v2075 = vpop.f32.mrb[0].mxu0
      %v2076 = vadd.f32 %v1897, %v2075
      %v2077 = vpop.f32.mrb[0].mxu0
      %2078 = vmatprep.mubr.f32.mxu0 0.0
      %2079 = vmatmul.mubr.f32.gmra.mrb[0].mxu0 %v1867
      %v2080 = vpop.f32.mrb[0].mxu0
      %v2081 = vadd.f32 %v1897, %v2080
      %v2082 = vpop.f32.mrb[0].mxu0
      %2083 = vmatprep.mubr.f32.mxu0 0.0
      %2084 = vmatmul.mubr.f32.gmra.mrb[0].mxu0 %v1868
      %v2085 = vpop.f32.mrb[0].mxu0
      %v2086 = vadd.f32 %v1897, %v2085
      %v2087 = vpop.f32.mrb[0].mxu0
      %2088 = vmatprep.mubr.f32.mxu0 0.0
      %2089 = vmatmul.mubr.f32.gmra.mrb[0].mxu0 %v1869
      %v2090 = vpop.f32.mrb[0].mxu0
      %v2091 = vadd.f32 %v1897, %v2090
      %v2092 = vpop.f32.mrb[0].mxu0
      %2093 = vmatprep.mubr.f32.mxu0 0.0
      %2094 = vmatmul.mubr.f32.gmra.mrb[0].mxu0 %v1870
      %v2095 = vpop.f32.mrb[0].mxu0
      %v2096 = vadd.f32 %v1897, %v2095
      %v2097 = vpop.f32.mrb[0].mxu0
      %2098 = vmatprep.mubr.f32.mxu0 0.0
      %2099 = vmatmul.mubr.f32.gmra.mrb[0].mxu0 %v1871
      %v2100 = vpop.f32.mrb[0].mxu0
      %v2101 = vadd.f32 %v1897, %v2100
      %v2102 = vpop.f32.mrb[0].mxu0
      %2103 = vmatprep.mubr.f32.mxu0 0.0
      %2104 = vmatmul.mubr.f32.gmra.mrb[0].mxu0 %v1872
      %v2105 = vpop.f32.mrb[0].mxu0
      %v2106 = vadd.f32 %v1897, %v2105
      %v2107 = vpop.f32.mrb[0].mxu0
      %2108 = vmatprep.mubr.f32.mxu0 0.0
      %2109 = vmatmul.mubr.f32.gmra.mrb[0].mxu0 %v1873
      %v2110 = vpop.f32.mrb[0].mxu0
      %v2111 = vadd.f32 %v1897, %v2110
      %v2112 = vpop.f32.mrb[0].mxu0
      %2113 = vmatprep.mubr.f32.mxu0 0.0
      %2114 = vmatmul.mubr.f32.gmra.mrb[0].mxu0 %v1874
      %v2115 = vpop.f32.mrb[0].mxu0
      %v2116 = vadd.f32 %v1897, %v2115
      %v2117 = vpop.f32.mrb[0].mxu0
      %2118 = vmatprep.mubr.f32.mxu0 0.0
      %2119 = vmatmul.mubr.f32.gmra.mrb[0].mxu0 %v1875
      %v2120 = vpop.f32.mrb[0].mxu0
      %v2121 = vadd.f32 %v1897, %v2120
      %v2122 = vpop.f32.mrb[0].mxu0
      %2123 = vdwg.mxu0
      %2124 = vst [vmem:[%s442] sm:$0xff] %v1966
      %2125 = vst [vmem:[%s442 + $0x8] sm:$0xff] %v1971
      %2126 = vst [vmem:[%s442 + $0x10] sm:$0xff] %v1976
      %2127 = vst [vmem:[%s442 + $0x18] sm:$0xff] %v1981
      %2128 = vst [vmem:[%s442 + $0x20] sm:$0xff] %v1986
      %2129 = vst [vmem:[%s442 + $0x28] sm:$0xff] %v1991
      %2130 = vst [vmem:[%s442 + $0x30] sm:$0xff] %v1996
      %2131 = vst [vmem:[%s442 + $0x38] sm:$0xff] %v2001
      %2132 = vst [vmem:[%s442 + $0x40] sm:$0xff] %v2006
      %2133 = vst [vmem:[%s442 + $0x48] sm:$0xff] %v2011
      %2134 = vst [vmem:[%s442 + $0x50] sm:$0xff] %v2016
      %2135 = vst [vmem:[%s442 + $0x58] sm:$0xff] %v2021
      %2136 = vst [vmem:[%s442 + $0x60] sm:$0xff] %v2026
      %2137 = vst [vmem:[%s442 + $0x68] sm:$0xff] %v2031
      %2138 = vst [vmem:[%s442 + $0x70] sm:$0xff] %v2036
      %2139 = vst [vmem:[%s442 + $0x78] sm:$0xff] %v2041
      %2140 = vst [vmem:[%s442 + $0x80] sm:$0xff] %v2046
      %2141 = vst [vmem:[%s442 + $0x88] sm:$0xff] %v2051
      %2142 = vst [vmem:[%s442 + $0x90] sm:$0xff] %v2056
      %2143 = vst [vmem:[%s442 + $0x98] sm:$0xff] %v2061
      %2144 = vst [vmem:[%s442 + $0xa0] sm:$0xff] %v2066
      %2145 = vst [vmem:[%s442 + $0xa8] sm:$0xff] %v2071
      %2146 = vst [vmem:[%s442 + $0xb0] sm:$0xff] %v2076
      %2147 = vst [vmem:[%s442 + $0xb8] sm:$0xff] %v2081
      %2148 = vst [vmem:[%s442 + $0xc0] sm:$0xff] %v2086
      %2149 = vst [vmem:[%s442 + $0xc8] sm:$0xff] %v2091
      %2150 = vst [vmem:[%s442 + $0xd0] sm:$0xff] %v2096
      %2151 = vst [vmem:[%s442 + $0xd8] sm:$0xff] %v2101
      %2152 = vst [vmem:[%s442 + $0xe0] sm:$0xff] %v2106
      %2153 = vst [vmem:[%s442 + $0xe8] sm:$0xff] %v2111
      %2154 = vst [vmem:[%s442 + $0xf0] sm:$0xff] %v2116
      %2155 = vst [vmem:[%s442 + $0xf8] sm:$0xff] %v2121
      %s2156 = smul.u32 32, %s24
      %p2157 = scmp.lt.s32.totalorder %s2156, 63
      %s2158 = scalar_select %p2157, %s2156, 63
      %s2159 = smul.addr %s2158, 8
      %s2160 = scalar_lea.vmem %s13, %s2159
      // Predicated region
      $region73: #{mlp_forward.1} parent=71 // pred_check
        %p2161 = pneg %p320
      $region74: #{mlp_forward.1} parent=71 // pred_check_branch
        %2163 = sbr.rel (%p2161) target = $region76
      $region75: #{mlp_forward.1} parent=71 // pred_region
        %s2164 = smul.u32 32, %s24
      $region76: #{mlp_forward.1} parent=71 // pred_fallthru
        _
    $region72: #{mlp_forward.1} parent=5 // pred_fallthru
      _
    %p2165 = scmp.le.s32.totalorder 2, %s19
    // Predicated region
    $region77: #{mlp_forward.1} parent=5 // pred_check
      %p2166 = pneg %p2165
    $region78: #{mlp_forward.1} parent=5 // pred_check_branch
      %2168 = sbr.rel (%p2166) target = $region80
    $region79: #{mlp_forward.1} parent=5 // pred_region
      %s2169 = ssub.s32 %s19, 2
      // Predicated region
      $region81: #{mlp_forward.1} parent=79 // pred_check
        %p2170 = pneg %p326
      $region82: #{mlp_forward.1} parent=79 // pred_check_branch
        %2172 = sbr.rel (%p2170) target = $region84
      $region83: #{mlp_forward.1} parent=79 // pred_region
        %s2173 = smul.u32 32, %s25
        %p2174 = scmp.lt.s32.totalorder %s2173, 63
        %s2175 = scalar_select %p2174, %s2173, 63
        %s2176 = smul.addr %s2175, 8
        %s2177 = scalar_lea.vmem %s13, %s2176
      $region84: #{mlp_forward.1} parent=79 // pred_fallthru
        _
    $region80: #{mlp_forward.1} parent=5 // pred_fallthru
      _
  $region6: #{mlp_forward.1} parent=0 // loop_footer
    %s23 = sadd.s32 1, %s19
  $region7: #{mlp_forward.1} parent=0 // loop_footer_branch
    %18 = sbr.rel target = $region3
  $region8: #{mlp_forward.1} parent=0 // loop_exit
    _

</llo_original>
